<compile_context>
chip_gen: v6e
topology: v6e:2x2x1
jax: 0.10.0
libtpu: 0.0.40
codegen_flags: <defaults>
</compile_context>

<pallas_src>
import functools

import jax
import jax.numpy as jnp
from jax.experimental import pallas as pl
from jax.experimental.pallas import tpu as pltpu

EMBED_DIM = 128
NUM_HEADS = 4
FF_DIM = 256
LN_EPS = 1e-6  # module spec uses nn.LayerNorm(..., eps=1e-06)


def _layernorm(x, gamma, beta, eps=LN_EPS):
    mu = jnp.mean(x, axis=-1, keepdims=True)
    var = jnp.mean((x - mu) ** 2, axis=-1, keepdims=True)
    return (x - mu) * jax.lax.rsqrt(var + eps) * gamma + beta


# Rows of the packed (9, E) vector-parameter slab.
_BQ, _BK, _BV, _BO, _B2, _G1, _BE1, _G2, _BE2 = range(9)


def _attention_ffn_core(num_heads, compute_dtype, bt, tq, tk,
                        x_res, qp, kp, vp,
                        wo_ref, w1_ref, w2_ref, vecs_ref, b1_ref, out_ref):
    """Shared tail: multi-head attention (projections already done),
    residual + LN1, FFN, residual + LN2.  Matmul accumulation in f32."""
    nq, E = x_res.shape
    H = num_heads
    hd = E // H

    qp3 = qp.reshape(bt, tq, E)
    kp3 = kp.reshape(bt, tk, E)
    vp3 = vp.reshape(bt, tk, E)

    # Per-head scores / softmax / context.  The batch dim of each einsum is the
    # sequence-block dim (verified-lowering 3-D dot_general); the short head
    # loop is Python-unrolled.
    # TODO(synk): for long sequences (T >~ 512-1k) tile over Tk with an online
    # (flash-style) softmax instead of materializing the full (bt,tq,tk) score.
    # TODO(synk): for very short Tk the score tensor uses only Tk of 128 lanes
    # in the softmax; acceptable here because attention FLOPs are negligible.
    ctx_heads = []
    for h in range(H):
        lo = h * hd
        qh = qp3[:, :, lo:lo + hd].astype(compute_dtype)     # (bt, tq, hd)
        kh = kp3[:, :, lo:lo + hd].astype(compute_dtype)     # (bt, tk, hd)
        vh = vp3[:, :, lo:lo + hd].astype(compute_dtype)     # (bt, tk, hd)
        # NOTE: the 1/sqrt(hd) scale is already folded into wq/bq host-side.
        s = jnp.einsum('bqd,bkd->bqk', qh, kh,
                       preferred_element_type=jnp.float32)    # (bt, tq, tk)
        s = s - jnp.max(s, axis=-1, keepdims=True)
        p = jnp.exp(s)
        p = p * pl.reciprocal(jnp.sum(p, axis=-1, keepdims=True), approx=True)
        ctx_heads.append(
            jnp.einsum('bqk,bkd->bqd', p.astype(compute_dtype), vh,
                       preferred_element_type=jnp.float32))   # (bt, tq, hd)

    # Assemble all heads once (single lane concat) and run ONE full-depth
    # (K = E) output projection instead of H partial K = hd matmuls.
    ctx = jnp.concatenate(ctx_heads, axis=-1).reshape(nq, E)
    attn = jnp.dot(ctx.astype(compute_dtype), wo_ref[...],
                   preferred_element_type=jnp.float32) + vecs_ref[_BO:_BO + 1, :]

    # Residual + LayerNorm 1 (dropout_1 is identity in eval mode); f32 math.
    x1 = _layernorm(x_res + attn,
                    vecs_ref[_G1:_G1 + 1, :], vecs_ref[_BE1:_BE1 + 1, :])

    # Feed-forward: Linear -> ReLU -> Linear.
    hmid = jnp.dot(x1.astype(compute_dtype), w1_ref[...],
                   preferred_element_type=jnp.float32) + b1_ref[...]
    hmid = jnp.maximum(hmid, 0.0)
    ffn = jnp.dot(hmid.astype(compute_dtype), w2_ref[...],
                  preferred_element_type=jnp.float32) + vecs_ref[_B2:_B2 + 1, :]

    # Residual + LayerNorm 2 (dropout_2 is identity in eval mode).
    x2 = _layernorm(x1 + ffn,
                    vecs_ref[_G2:_G2 + 1, :], vecs_ref[_BE2:_BE2 + 1, :])
    out_ref[...] = x2.reshape(bt, tq, E).astype(out_ref.dtype)


def _encoder_kernel_self(num_heads, compute_dtype,
                         x_ref,
                         w_qkv_ref, wo_ref, w1_ref, w2_ref, vecs_ref, b1_ref,
                         out_ref):
    """Self-attention path: single fused QKV matmul, input DMA'd once."""
    bt, t, E = x_ref.shape
    x_raw = x_ref[...]
    x2 = x_raw.reshape(bt * t, E).astype(compute_dtype)

    qkv = jnp.dot(x2, w_qkv_ref[...], preferred_element_type=jnp.float32)
    qp = qkv[:, 0:E] + vecs_ref[_BQ:_BQ + 1, :]
    kp = qkv[:, E:2 * E] + vecs_ref[_BK:_BK + 1, :]
    vp = qkv[:, 2 * E:3 * E] + vecs_ref[_BV:_BV + 1, :]

    x_res = x_raw.reshape(bt * t, E).astype(jnp.float32)
    _attention_ffn_core(num_heads, compute_dtype, bt, t, t, x_res, qp, kp, vp,
                        wo_ref, w1_ref, w2_ref, vecs_ref, b1_ref, out_ref)


def _encoder_kernel_kv_shared(num_heads, compute_dtype,
                              q_ref, kv_ref,
                              w_qkv_ref, wo_ref, w1_ref, w2_ref, vecs_ref,
                              b1_ref, out_ref):
    """Cross-attention with key is value: one K/V stream, fused K/V matmul."""
    bt, tq, E = q_ref.shape
    tk = kv_ref.shape[1]
    q_raw = q_ref[...]
    q2 = q_raw.reshape(bt * tq, E).astype(compute_dtype)
    kv2 = kv_ref[...].reshape(bt * tk, E).astype(compute_dtype)

    qp = jnp.dot(q2, w_qkv_ref[:, 0:E],
                 preferred_element_type=jnp.float32) + vecs_ref[_BQ:_BQ + 1, :]
    kvp = jnp.dot(kv2, w_qkv_ref[:, E:3 * E],
                  preferred_element_type=jnp.float32)
    kp = kvp[:, 0:E] + vecs_ref[_BK:_BK + 1, :]
    vp = kvp[:, E:2 * E] + vecs_ref[_BV:_BV + 1, :]

    x_res = q_raw.reshape(bt * tq, E).astype(jnp.float32)
    _attention_ffn_core(num_heads, compute_dtype, bt, tq, tk, x_res, qp, kp, vp,
                        wo_ref, w1_ref, w2_ref, vecs_ref, b1_ref, out_ref)


def _encoder_kernel(num_heads, compute_dtype,
                    q_ref, k_ref, v_ref,
                    w_qkv_ref, wo_ref, w1_ref, w2_ref, vecs_ref, b1_ref,
                    out_ref):
    """General path: query / key / value may all differ."""
    bt, tq, E = q_ref.shape
    tk = k_ref.shape[1]
    q_raw = q_ref[...]
    q2 = q_raw.reshape(bt * tq, E).astype(compute_dtype)
    k2 = k_ref[...].reshape(bt * tk, E).astype(compute_dtype)
    v2 = v_ref[...].reshape(bt * tk, E).astype(compute_dtype)

    qp = jnp.dot(q2, w_qkv_ref[:, 0:E],
                 preferred_element_type=jnp.float32) + vecs_ref[_BQ:_BQ + 1, :]
    kp = jnp.dot(k2, w_qkv_ref[:, E:2 * E],
                 preferred_element_type=jnp.float32) + vecs_ref[_BK:_BK + 1, :]
    vp = jnp.dot(v2, w_qkv_ref[:, 2 * E:3 * E],
                 preferred_element_type=jnp.float32) + vecs_ref[_BV:_BV + 1, :]

    x_res = q_raw.reshape(bt * tq, E).astype(jnp.float32)
    _attention_ffn_core(num_heads, compute_dtype, bt, tq, tk, x_res, qp, kp, vp,
                        wo_ref, w1_ref, w2_ref, vecs_ref, b1_ref, out_ref)


def _tpu_topology():
    """Returns (per-core VMEM capacity in bytes, chip likely has >=2 TCs)."""
    vmem_cap = 128 * 1024 * 1024
    multi_tc = False
    try:
        info = pltpu.get_tpu_info()
        cap = getattr(info, "vmem_capacity_bytes", None)
        if cap:
            vmem_cap = int(cap)
    except Exception:
        pass
    try:
        kind = jax.devices()[0].device_kind.lower()
        multi_tc = "v7" in kind
    except Exception:
        pass
    # v7x-class cores also identify themselves by their 64 MiB VMEM.
    if vmem_cap <= 64 * 1024 * 1024:
        multi_tc = True
    return vmem_cap, multi_tc


def _pick_block_batch(batch, tq, tk, e, ff, in_itemsize, out_itemsize,
                      vmem_budget, n_kv_streams, target_rows=1024,
                      require_two_steps=False):
    """Largest divisor Bt of `batch` whose per-step footprint (including
    attention intermediates that scale with Bt*T and Bt*T^2) fits the VMEM
    budget and whose row block Bt*Tq stays near `target_rows`.  When the chip
    has two TensorCores, keep the grid length >= 2 so the parallel axis can
    shard across both cores."""

    def step_vmem_bytes(bt):
        nq, nk = bt * tq, bt * tk
        b = 0
        # double-buffered HBM<->VMEM activation blocks
        b += 2 * nq * e * in_itemsize                       # q / x block
        b += 2 * n_kv_streams * nk * e * in_itemsize        # k (,v) blocks
        b += 2 * nq * e * out_itemsize                      # output block
        # parameter slabs (double-buffered: bf16 weights + f32 vectors)
        b += 2 * ((3 * e * e + e * e + e * ff + ff * e) * 2 + (9 * e + ff) * 4)
        # in-kernel intermediates (f32 accumulators + bf16 matmul copies)
        b += nq * 3 * e * 4 + nk * 2 * e * 4                # fused projections
        b += (nq + 2 * nk) * e * 2                          # bf16 copies
        b += 4 * bt * tq * tk * 4                           # live score/prob tiles
        b += 2 * nq * e * 4                                 # ctx heads + concat
        b += 4 * nq * e * 4                                 # attn, x1, ffn, x2
        b += nq * ff * (4 + 2)                              # FFN hidden
        return int(b * 1.25)                                # fragmentation margin

    max_bt = batch
    if require_two_steps and batch >= 2:
        max_bt = max(1, batch // 2)

    best = 1
    for bt in range(1, max_bt + 1):
        if batch % bt:
            continue
        if bt * tq > max(target_rows, tq):
            continue
        if step_vmem_bytes(bt) > vmem_budget:
            continue
        best = bt
    return best


def _pack_params(params, num_heads, compute_dtype):
    """Fold attention scale into wq/bq, fuse QKV weights, pack vector params."""
    E = params["wq"].shape[0]
    hd = E // num_heads
    scale = 1.0 / (hd ** 0.5)
    w_qkv = jnp.concatenate(
        [params["wq"] * scale, params["wk"], params["wv"]], axis=1
    ).astype(compute_dtype)                                        # (E, 3E)
    wo = params["wo"].astype(compute_dtype)                        # (E, E)
    w1 = params["w1"].astype(compute_dtype)                        # (E, FF)
    w2 = params["w2"].astype(compute_dtype)                        # (FF, E)
    vecs = jnp.concatenate(
        [params["bq"] * scale, params["bk"], params["bv"], params["bo"],
         params["b2"], params["g1"], params["beta1"],
         params["g2"], params["beta2"]], axis=0).astype(jnp.float32)  # (9, E)
    b1 = params["b1"].astype(jnp.float32)                          # (1, FF)
    return w_qkv, wo, w1, w2, vecs, b1


def transformer_encoder(query, key, value, params, num_heads=NUM_HEADS,
                        compute_dtype=jnp.bfloat16, io_dtype=jnp.bfloat16,
                        out_dtype=None, block_batch=None):
    B, Tq, E = query.shape
    Tk = key.shape[1]
    ff = params["w1"].shape[1]
    if out_dtype is None:
        out_dtype = query.dtype

    # Python-level fast-path detection (object identity => same HBM buffer).
    self_attn = (key is query) and (value is query)
    kv_shared = (not self_attn) and (key is value)

    # Per-generation VMEM budget (~48 MiB on 64-MiB v7x cores, ~96 MiB on
    # 128-MiB v5e/v6e) and dual-TensorCore detection.
    vmem_cap, multi_tc = _tpu_topology()
    vmem_limit = min(int(vmem_cap * 3 // 4), 100 * 1024 * 1024)
    target_rows = 512 if multi_tc else 1024

    in_itemsize = jnp.dtype(io_dtype).itemsize
    out_itemsize = jnp.dtype(out_dtype).itemsize

    if block_batch is None:
        n_kv = 0 if self_attn else (1 if kv_shared else 2)
        block_batch = _pick_block_batch(
            B, Tq, Tk, E, ff, in_itemsize, out_itemsize,
            vmem_budget=vmem_limit, n_kv_streams=n_kv,
            target_rows=target_rows, require_two_steps=multi_tc)
    assert B % block_batch == 0
    Bt = block_batch
    grid = (B // Bt,)

    w_qkv, wo, w1, w2, vecs, b1 = _pack_params(params, num_heads, compute_dtype)

    # bf16 at the HBM boundary (halves input DMA traffic); residual / softmax /
    # LayerNorm math stays f32 inside the kernel.
    q_in = query.astype(io_dtype)
    k_in = key.astype(io_dtype)
    v_in = value.astype(io_dtype)

    def rep(shape):  # replicated (non-blocked) parameter spec
        return pl.BlockSpec(shape, lambda b, _s=len(shape): (0,) * _s)

    seq_q = pl.BlockSpec((Bt, Tq, E), lambda b: (b, 0, 0))
    seq_k = pl.BlockSpec((Bt, Tk, E), lambda b: (b, 0, 0))
    param_specs = [rep((E, 3 * E)), rep((E, E)), rep((E, ff)), rep((ff, E)),
                   rep((9, E)), rep((1, ff))]
    param_operands = (w_qkv, wo, w1, w2, vecs, b1)

    if self_attn:
        kernel = functools.partial(_encoder_kernel_self, num_heads, compute_dtype)
        in_specs = [seq_q] + param_specs
        operands = (q_in,) + param_operands
    elif kv_shared:
        kernel = functools.partial(_encoder_kernel_kv_shared, num_heads, compute_dtype)
        in_specs = [seq_q, seq_k] + param_specs
        operands = (q_in, k_in) + param_operands
    else:
        kernel = functools.partial(_encoder_kernel, num_heads, compute_dtype)
        in_specs = [seq_q, seq_k, seq_k] + param_specs
        operands = (q_in, k_in, v_in) + param_operands

    return pl.pallas_call(
        kernel,
        out_shape=jax.ShapeDtypeStruct((B, Tq, E), out_dtype),
        grid_spec=pltpu.PrefetchScalarGridSpec(
            num_scalar_prefetch=0,
            grid=grid,
            in_specs=in_specs,
            out_specs=pl.BlockSpec((Bt, Tq, E), lambda b: (b, 0, 0)),
        ),
        compiler_params=pltpu.CompilerParams(
            dimension_semantics=("parallel",),
            vmem_limit_bytes=vmem_limit,
        ),
    )(*operands)


def _reference(query, key, value, params, num_heads=NUM_HEADS):
    """Pure-JAX f32 reference mirroring the PyTorch forward (eval mode)."""
    B, Tq, E = query.shape
    hd = E // num_heads

    def proj(x, w, b):
        return x @ w + b

    qp = proj(query, params["wq"], params["bq"])
    kp = proj(key, params["wk"], params["bk"])
    vp = proj(value, params["wv"], params["bv"])

    qh = qp.reshape(B, Tq, num_heads, hd).transpose(0, 2, 1, 3)
    kh = kp.reshape(B, -1, num_heads, hd).transpose(0, 2, 1, 3)
    vh = vp.reshape(B, -1, num_heads, hd).transpose(0, 2, 1, 3)

    s = jnp.einsum("bhqd,bhkd->bhqk", qh, kh) / (hd ** 0.5)
    p = jax.nn.softmax(s, axis=-1)
    ctx = jnp.einsum("bhqk,bhkd->bhqd", p, vh)
    ctx = ctx.transpose(0, 2, 1, 3).reshape(B, Tq, E)
    attn_out = proj(ctx, params["wo"], params["bo"])

    def ln(x, g, b):
        mu = jnp.mean(x, axis=-1, keepdims=True)
        var = jnp.mean((x - mu) ** 2, axis=-1, keepdims=True)
        return (x - mu) * jax.lax.rsqrt(var + LN_EPS) * g + b

    x1 = ln(query + attn_out, params["g1"], params["beta1"])
    h = jax.nn.relu(proj(x1, params["w1"], params["b1"]))
    ffn_out = proj(h, params["w2"], params["b2"])
    return ln(x1 + ffn_out, params["g2"], params["beta2"])


def init_params(key, embed_dim=EMBED_DIM, ff_dim=FF_DIM):
    ks = jax.random.split(key, 12)
    n = lambda k, shape, s=0.02: (s * jax.random.normal(k, shape)).astype(jnp.float32)
    return {
        # weights stored (in_features, out_features) = PyTorch W.T
        "wq": n(ks[0], (embed_dim, embed_dim)),
        "wk": n(ks[1], (embed_dim, embed_dim)),
        "wv": n(ks[2], (embed_dim, embed_dim)),
        "bq": n(ks[3], (1, embed_dim)),
        "bk": n(ks[4], (1, embed_dim)),
        "bv": n(ks[5], (1, embed_dim)),
        "wo": n(ks[6], (embed_dim, embed_dim)),
        "bo": n(ks[7], (1, embed_dim)),
        "w1": n(ks[8], (embed_dim, ff_dim)),
        "b1": n(ks[9], (1, ff_dim)),
        "w2": n(ks[10], (ff_dim, embed_dim)),
        "b2": n(ks[11], (1, embed_dim)),
        # LayerNorm params (PyTorch default init)
        "g1": jnp.ones((1, embed_dim), jnp.float32),
        "beta1": jnp.zeros((1, embed_dim), jnp.float32),
        "g2": jnp.ones((1, embed_dim), jnp.float32),
        "beta2": jnp.zeros((1, embed_dim), jnp.float32),
    }


if __name__ == "__main__":
    root = jax.random.PRNGKey(0)
    kq, kk, kv, kp = jax.random.split(root, 4)

    B, T, E = 2, 8, EMBED_DIM
    query = jax.random.normal(kq, (B, T, E), jnp.float32)
    key_in = jax.random.normal(kk, (B, T, E), jnp.float32)
    value = jax.random.normal(kv, (B, T, E), jnp.float32)
    params = init_params(kp)

    # bf16 HBM I/O + bf16 MXU inputs vs f32 reference -> loosened tolerance.
    TOL = dict(atol=3e-2, rtol=3e-2)

    # 1) General path (query / key / value all differ).
    out = jax.block_until_ready(transformer_encoder(query, key_in, value, params))
    ref = _reference(query, key_in, value, params)
    assert out.shape == (B, T, E)
    assert jnp.allclose(out, ref, **TOL), "general-path mismatch vs JAX reference"

    # 2) key-is-value path (single K/V stream, fused K/V projection).
    out_kv = jax.block_until_ready(transformer_encoder(query, key_in, key_in, params))
    ref_kv = _reference(query, key_in, key_in, params)
    assert jnp.allclose(out_kv, ref_kv, **TOL), "kv-shared-path mismatch vs JAX reference"

    # 3) Self-attention path (fused single QKV matmul, one activation stream).
    out_sa = jax.block_until_ready(transformer_encoder(query, query, query, params))
    ref_sa = _reference(query, query, query, params)
    assert jnp.allclose(out_sa, ref_sa, **TOL), "self-attn-path mismatch vs JAX reference"

    print("KERNEL_OK")
</pallas_src>

<mosaic_0001>
module attributes {stable_mosaic.version = 11 : i64} {
  func.func @_encoder_kernel(%arg0: i32, %arg1: memref<2x8x128xbf16, #tpu.memory_space<vmem>>, %arg2: memref<2x8x128xbf16, #tpu.memory_space<vmem>>, %arg3: memref<2x8x128xbf16, #tpu.memory_space<vmem>>, %arg4: memref<128x384xbf16, #tpu.memory_space<vmem>>, %arg5: memref<128x128xbf16, #tpu.memory_space<vmem>>, %arg6: memref<128x256xbf16, #tpu.memory_space<vmem>>, %arg7: memref<256x128xbf16, #tpu.memory_space<vmem>>, %arg8: memref<9x128xf32, #tpu.memory_space<vmem>>, %arg9: memref<1x256xf32, #tpu.memory_space<vmem>>, %arg10: memref<2x8x128xf32, #tpu.memory_space<vmem>>) attributes {dimension_semantics = [#tpu.dimension_semantics<parallel>], iteration_bounds = array<i64: 1>, scalar_prefetch = 0 : i64, scratch_operands = 0 : i64, tpu.core_type = #tpu.core_type<tc>, window_params = [{transform_indices = @transform_0, window_bounds = array<i64: 2, 8, 128>}, {transform_indices = @transform_1, window_bounds = array<i64: 2, 8, 128>}, {transform_indices = @transform_2, window_bounds = array<i64: 2, 8, 128>}, {pipeline_mode = #tpu.pipeline_mode<synchronous>, transform_indices = @transform_3, window_bounds = array<i64: 128, 384>}, {pipeline_mode = #tpu.pipeline_mode<synchronous>, transform_indices = @transform_4, window_bounds = array<i64: 128, 128>}, {pipeline_mode = #tpu.pipeline_mode<synchronous>, transform_indices = @transform_5, window_bounds = array<i64: 128, 256>}, {pipeline_mode = #tpu.pipeline_mode<synchronous>, transform_indices = @transform_6, window_bounds = array<i64: 256, 128>}, {pipeline_mode = #tpu.pipeline_mode<synchronous>, transform_indices = @transform_7, window_bounds = array<i64: 9, 128>}, {pipeline_mode = #tpu.pipeline_mode<synchronous>, transform_indices = @transform_8, window_bounds = array<i64: 1, 256>}, {transform_indices = @transform_9, window_bounds = array<i64: 2, 8, 128>}]} {
    %c0 = arith.constant 0 : index
    %c0_0 = arith.constant 0 : index
    %c0_1 = arith.constant 0 : index
    %0 = vector.load %arg1[%c0, %c0_0, %c0_1] : memref<2x8x128xbf16, #tpu.memory_space<vmem>>, vector<2x8x128xbf16>
    %1 = vector.shape_cast %0 : vector<2x8x128xbf16> to vector<16x128xbf16>
    %c0_2 = arith.constant 0 : index
    %c0_3 = arith.constant 0 : index
    %c0_4 = arith.constant 0 : index
    %2 = vector.load %arg2[%c0_2, %c0_3, %c0_4] : memref<2x8x128xbf16, #tpu.memory_space<vmem>>, vector<2x8x128xbf16>
    %3 = vector.shape_cast %2 : vector<2x8x128xbf16> to vector<16x128xbf16>
    %c0_5 = arith.constant 0 : index
    %c0_6 = arith.constant 0 : index
    %c0_7 = arith.constant 0 : index
    %4 = vector.load %arg3[%c0_5, %c0_6, %c0_7] : memref<2x8x128xbf16, #tpu.memory_space<vmem>>, vector<2x8x128xbf16>
    %5 = vector.shape_cast %4 : vector<2x8x128xbf16> to vector<16x128xbf16>
    %c0_8 = arith.constant 0 : index
    %c0_9 = arith.constant 0 : index
    %6 = vector.load %arg4[%c0_8, %c0_9] : memref<128x384xbf16, #tpu.memory_space<vmem>>, vector<128x128xbf16>
    %cst = arith.constant dense<0.000000e+00> : vector<16x128xf32>
    %7 = tpu.matmul %1, %6, %cst {dimension_numbers = #tpu.dot_dimension_numbers<[1], [0], [0], [1], [0, 0, 1, 1], [], []>} : vector<16x128xbf16>, vector<128x128xbf16>, vector<16x128xf32> -> vector<16x128xf32>
    %c0_10 = arith.constant 0 : index
    %c0_11 = arith.constant 0 : index
    %8 = vector.load %arg8[%c0_10, %c0_11] : memref<9x128xf32, #tpu.memory_space<vmem>>, vector<1x128xf32>
    %9 = vector.broadcast %8 : vector<1x128xf32> to vector<16x128xf32>
    %10 = arith.addf %7, %9 : vector<16x128xf32>
    %c0_12 = arith.constant 0 : index
    %c128 = arith.constant 128 : index
    %11 = vector.load %arg4[%c0_12, %c128] : memref<128x384xbf16, #tpu.memory_space<vmem>>, vector<128x128xbf16>
    %cst_13 = arith.constant dense<0.000000e+00> : vector<16x128xf32>
    %12 = tpu.matmul %3, %11, %cst_13 {dimension_numbers = #tpu.dot_dimension_numbers<[1], [0], [0], [1], [0, 0, 1, 1], [], []>} : vector<16x128xbf16>, vector<128x128xbf16>, vector<16x128xf32> -> vector<16x128xf32>
    %c1 = arith.constant 1 : index
    %c0_14 = arith.constant 0 : index
    %13 = vector.load %arg8[%c1, %c0_14] : memref<9x128xf32, #tpu.memory_space<vmem>>, vector<1x128xf32>
    %14 = vector.broadcast %13 : vector<1x128xf32> to vector<16x128xf32>
    %15 = arith.addf %12, %14 : vector<16x128xf32>
    %c0_15 = arith.constant 0 : index
    %c256 = arith.constant 256 : index
    %16 = vector.load %arg4[%c0_15, %c256] : memref<128x384xbf16, #tpu.memory_space<vmem>>, vector<128x128xbf16>
    %cst_16 = arith.constant dense<0.000000e+00> : vector<16x128xf32>
    %17 = tpu.matmul %5, %16, %cst_16 {dimension_numbers = #tpu.dot_dimension_numbers<[1], [0], [0], [1], [0, 0, 1, 1], [], []>} : vector<16x128xbf16>, vector<128x128xbf16>, vector<16x128xf32> -> vector<16x128xf32>
    %c2 = arith.constant 2 : index
    %c0_17 = arith.constant 0 : index
    %18 = vector.load %arg8[%c2, %c0_17] : memref<9x128xf32, #tpu.memory_space<vmem>>, vector<1x128xf32>
    %19 = vector.broadcast %18 : vector<1x128xf32> to vector<16x128xf32>
    %20 = arith.addf %17, %19 : vector<16x128xf32>
    %21 = vector.shape_cast %0 : vector<2x8x128xbf16> to vector<16x128xbf16>
    %22 = arith.extf %21 : vector<16x128xbf16> to vector<16x128xf32>
    %23 = vector.shape_cast %10 : vector<16x128xf32> to vector<2x8x128xf32>
    %24 = vector.shape_cast %15 : vector<16x128xf32> to vector<2x8x128xf32>
    %25 = vector.shape_cast %20 : vector<16x128xf32> to vector<2x8x128xf32>
    %26 = vector.extract_strided_slice %23 {offsets = [0, 0, 0], sizes = [2, 8, 32], strides = [1, 1, 1]} : vector<2x8x128xf32> to vector<2x8x32xf32>
    %27 = arith.truncf %26 : vector<2x8x32xf32> to vector<2x8x32xbf16>
    %28 = vector.extract_strided_slice %24 {offsets = [0, 0, 0], sizes = [2, 8, 32], strides = [1, 1, 1]} : vector<2x8x128xf32> to vector<2x8x32xf32>
    %29 = arith.truncf %28 : vector<2x8x32xf32> to vector<2x8x32xbf16>
    %30 = vector.extract_strided_slice %25 {offsets = [0, 0, 0], sizes = [2, 8, 32], strides = [1, 1, 1]} : vector<2x8x128xf32> to vector<2x8x32xf32>
    %31 = arith.truncf %30 : vector<2x8x32xf32> to vector<2x8x32xbf16>
    "tpu.trace_start"() <{level = 10 : i32, message = "bqd,bkd->bqk"}> : () -> ()
    %cst_18 = arith.constant dense<0.000000e+00> : vector<2x8x8xf32>
    %32 = tpu.matmul %27, %29, %cst_18 {dimension_numbers = #tpu.dot_dimension_numbers<[2], [2], [1], [1], [0, 0, 0, 1, 1, 1], [0], [0]>} : vector<2x8x32xbf16>, vector<2x8x32xbf16>, vector<2x8x8xf32> -> vector<2x8x8xf32>
    "tpu.trace_stop"() : () -> ()
    %cst_19 = arith.constant dense<0xFF800000> : vector<2x8xf32>
    %33 = vector.multi_reduction <maximumf>, %32, %cst_19 [2] : vector<2x8x8xf32> to vector<2x8xf32>
    %34 = vector.shape_cast %33 : vector<2x8xf32> to vector<2x8x1xf32>
    %35 = vector.broadcast %34 : vector<2x8x1xf32> to vector<2x8x8xf32>
    %36 = arith.subf %32, %35 : vector<2x8x8xf32>
    %37 = math.exp %36 : vector<2x8x8xf32>
    %cst_20 = arith.constant dense<0.000000e+00> : vector<2x8xf32>
    %38 = vector.multi_reduction <add>, %37, %cst_20 [2] : vector<2x8x8xf32> to vector<2x8xf32>
    %39 = vector.shape_cast %38 : vector<2x8xf32> to vector<2x8x1xf32>
    %40 = tpu.reciprocal %39 {approx = true} : vector<2x8x1xf32> -> vector<2x8x1xf32>
    %41 = vector.broadcast %40 : vector<2x8x1xf32> to vector<2x8x8xf32>
    %42 = arith.mulf %37, %41 : vector<2x8x8xf32>
    %43 = arith.truncf %42 : vector<2x8x8xf32> to vector<2x8x8xbf16>
    "tpu.trace_start"() <{level = 10 : i32, message = "bqk,bkd->bqd"}> : () -> ()
    %cst_21 = arith.constant dense<0.000000e+00> : vector<2x8x32xf32>
    %44 = tpu.matmul %43, %31, %cst_21 {dimension_numbers = #tpu.dot_dimension_numbers<[2], [1], [1], [2], [0, 0, 0, 1, 1, 2], [0], [0]>} : vector<2x8x8xbf16>, vector<2x8x32xbf16>, vector<2x8x32xf32> -> vector<2x8x32xf32>
    "tpu.trace_stop"() : () -> ()
    %45 = vector.extract_strided_slice %23 {offsets = [0, 0, 32], sizes = [2, 8, 32], strides = [1, 1, 1]} : vector<2x8x128xf32> to vector<2x8x32xf32>
    %46 = arith.truncf %45 : vector<2x8x32xf32> to vector<2x8x32xbf16>
    %47 = vector.extract_strided_slice %24 {offsets = [0, 0, 32], sizes = [2, 8, 32], strides = [1, 1, 1]} : vector<2x8x128xf32> to vector<2x8x32xf32>
    %48 = arith.truncf %47 : vector<2x8x32xf32> to vector<2x8x32xbf16>
    %49 = vector.extract_strided_slice %25 {offsets = [0, 0, 32], sizes = [2, 8, 32], strides = [1, 1, 1]} : vector<2x8x128xf32> to vector<2x8x32xf32>
    %50 = arith.truncf %49 : vector<2x8x32xf32> to vector<2x8x32xbf16>
    "tpu.trace_start"() <{level = 10 : i32, message = "bqd,bkd->bqk"}> : () -> ()
    %cst_22 = arith.constant dense<0.000000e+00> : vector<2x8x8xf32>
    %51 = tpu.matmul %46, %48, %cst_22 {dimension_numbers = #tpu.dot_dimension_numbers<[2], [2], [1], [1], [0, 0, 0, 1, 1, 1], [0], [0]>} : vector<2x8x32xbf16>, vector<2x8x32xbf16>, vector<2x8x8xf32> -> vector<2x8x8xf32>
    "tpu.trace_stop"() : () -> ()
    %cst_23 = arith.constant dense<0xFF800000> : vector<2x8xf32>
    %52 = vector.multi_reduction <maximumf>, %51, %cst_23 [2] : vector<2x8x8xf32> to vector<2x8xf32>
    %53 = vector.shape_cast %52 : vector<2x8xf32> to vector<2x8x1xf32>
    %54 = vector.broadcast %53 : vector<2x8x1xf32> to vector<2x8x8xf32>
    %55 = arith.subf %51, %54 : vector<2x8x8xf32>
    %56 = math.exp %55 : vector<2x8x8xf32>
    %cst_24 = arith.constant dense<0.000000e+00> : vector<2x8xf32>
    %57 = vector.multi_reduction <add>, %56, %cst_24 [2] : vector<2x8x8xf32> to vector<2x8xf32>
    %58 = vector.shape_cast %57 : vector<2x8xf32> to vector<2x8x1xf32>
    %59 = tpu.reciprocal %58 {approx = true} : vector<2x8x1xf32> -> vector<2x8x1xf32>
    %60 = vector.broadcast %59 : vector<2x8x1xf32> to vector<2x8x8xf32>
    %61 = arith.mulf %56, %60 : vector<2x8x8xf32>
    %62 = arith.truncf %61 : vector<2x8x8xf32> to vector<2x8x8xbf16>
    "tpu.trace_start"() <{level = 10 : i32, message = "bqk,bkd->bqd"}> : () -> ()
    %cst_25 = arith.constant dense<0.000000e+00> : vector<2x8x32xf32>
    %63 = tpu.matmul %62, %50, %cst_25 {dimension_numbers = #tpu.dot_dimension_numbers<[2], [1], [1], [2], [0, 0, 0, 1, 1, 2], [0], [0]>} : vector<2x8x8xbf16>, vector<2x8x32xbf16>, vector<2x8x32xf32> -> vector<2x8x32xf32>
    "tpu.trace_stop"() : () -> ()
    %64 = vector.extract_strided_slice %23 {offsets = [0, 0, 64], sizes = [2, 8, 32], strides = [1, 1, 1]} : vector<2x8x128xf32> to vector<2x8x32xf32>
    %65 = arith.truncf %64 : vector<2x8x32xf32> to vector<2x8x32xbf16>
    %66 = vector.extract_strided_slice %24 {offsets = [0, 0, 64], sizes = [2, 8, 32], strides = [1, 1, 1]} : vector<2x8x128xf32> to vector<2x8x32xf32>
    %67 = arith.truncf %66 : vector<2x8x32xf32> to vector<2x8x32xbf16>
    %68 = vector.extract_strided_slice %25 {offsets = [0, 0, 64], sizes = [2, 8, 32], strides = [1, 1, 1]} : vector<2x8x128xf32> to vector<2x8x32xf32>
    %69 = arith.truncf %68 : vector<2x8x32xf32> to vector<2x8x32xbf16>
    "tpu.trace_start"() <{level = 10 : i32, message = "bqd,bkd->bqk"}> : () -> ()
    %cst_26 = arith.constant dense<0.000000e+00> : vector<2x8x8xf32>
    %70 = tpu.matmul %65, %67, %cst_26 {dimension_numbers = #tpu.dot_dimension_numbers<[2], [2], [1], [1], [0, 0, 0, 1, 1, 1], [0], [0]>} : vector<2x8x32xbf16>, vector<2x8x32xbf16>, vector<2x8x8xf32> -> vector<2x8x8xf32>
    "tpu.trace_stop"() : () -> ()
    %cst_27 = arith.constant dense<0xFF800000> : vector<2x8xf32>
    %71 = vector.multi_reduction <maximumf>, %70, %cst_27 [2] : vector<2x8x8xf32> to vector<2x8xf32>
    %72 = vector.shape_cast %71 : vector<2x8xf32> to vector<2x8x1xf32>
    %73 = vector.broadcast %72 : vector<2x8x1xf32> to vector<2x8x8xf32>
    %74 = arith.subf %70, %73 : vector<2x8x8xf32>
    %75 = math.exp %74 : vector<2x8x8xf32>
    %cst_28 = arith.constant dense<0.000000e+00> : vector<2x8xf32>
    %76 = vector.multi_reduction <add>, %75, %cst_28 [2] : vector<2x8x8xf32> to vector<2x8xf32>
    %77 = vector.shape_cast %76 : vector<2x8xf32> to vector<2x8x1xf32>
    %78 = tpu.reciprocal %77 {approx = true} : vector<2x8x1xf32> -> vector<2x8x1xf32>
    %79 = vector.broadcast %78 : vector<2x8x1xf32> to vector<2x8x8xf32>
    %80 = arith.mulf %75, %79 : vector<2x8x8xf32>
    %81 = arith.truncf %80 : vector<2x8x8xf32> to vector<2x8x8xbf16>
    "tpu.trace_start"() <{level = 10 : i32, message = "bqk,bkd->bqd"}> : () -> ()
    %cst_29 = arith.constant dense<0.000000e+00> : vector<2x8x32xf32>
    %82 = tpu.matmul %81, %69, %cst_29 {dimension_numbers = #tpu.dot_dimension_numbers<[2], [1], [1], [2], [0, 0, 0, 1, 1, 2], [0], [0]>} : vector<2x8x8xbf16>, vector<2x8x32xbf16>, vector<2x8x32xf32> -> vector<2x8x32xf32>
    "tpu.trace_stop"() : () -> ()
    %83 = vector.extract_strided_slice %23 {offsets = [0, 0, 96], sizes = [2, 8, 32], strides = [1, 1, 1]} : vector<2x8x128xf32> to vector<2x8x32xf32>
    %84 = arith.truncf %83 : vector<2x8x32xf32> to vector<2x8x32xbf16>
    %85 = vector.extract_strided_slice %24 {offsets = [0, 0, 96], sizes = [2, 8, 32], strides = [1, 1, 1]} : vector<2x8x128xf32> to vector<2x8x32xf32>
    %86 = arith.truncf %85 : vector<2x8x32xf32> to vector<2x8x32xbf16>
    %87 = vector.extract_strided_slice %25 {offsets = [0, 0, 96], sizes = [2, 8, 32], strides = [1, 1, 1]} : vector<2x8x128xf32> to vector<2x8x32xf32>
    %88 = arith.truncf %87 : vector<2x8x32xf32> to vector<2x8x32xbf16>
    "tpu.trace_start"() <{level = 10 : i32, message = "bqd,bkd->bqk"}> : () -> ()
    %cst_30 = arith.constant dense<0.000000e+00> : vector<2x8x8xf32>
    %89 = tpu.matmul %84, %86, %cst_30 {dimension_numbers = #tpu.dot_dimension_numbers<[2], [2], [1], [1], [0, 0, 0, 1, 1, 1], [0], [0]>} : vector<2x8x32xbf16>, vector<2x8x32xbf16>, vector<2x8x8xf32> -> vector<2x8x8xf32>
    "tpu.trace_stop"() : () -> ()
    %cst_31 = arith.constant dense<0xFF800000> : vector<2x8xf32>
    %90 = vector.multi_reduction <maximumf>, %89, %cst_31 [2] : vector<2x8x8xf32> to vector<2x8xf32>
    %91 = vector.shape_cast %90 : vector<2x8xf32> to vector<2x8x1xf32>
    %92 = vector.broadcast %91 : vector<2x8x1xf32> to vector<2x8x8xf32>
    %93 = arith.subf %89, %92 : vector<2x8x8xf32>
    %94 = math.exp %93 : vector<2x8x8xf32>
    %cst_32 = arith.constant dense<0.000000e+00> : vector<2x8xf32>
    %95 = vector.multi_reduction <add>, %94, %cst_32 [2] : vector<2x8x8xf32> to vector<2x8xf32>
    %96 = vector.shape_cast %95 : vector<2x8xf32> to vector<2x8x1xf32>
    %97 = tpu.reciprocal %96 {approx = true} : vector<2x8x1xf32> -> vector<2x8x1xf32>
    %98 = vector.broadcast %97 : vector<2x8x1xf32> to vector<2x8x8xf32>
    %99 = arith.mulf %94, %98 : vector<2x8x8xf32>
    %100 = arith.truncf %99 : vector<2x8x8xf32> to vector<2x8x8xbf16>
    "tpu.trace_start"() <{level = 10 : i32, message = "bqk,bkd->bqd"}> : () -> ()
    %cst_33 = arith.constant dense<0.000000e+00> : vector<2x8x32xf32>
    %101 = tpu.matmul %100, %88, %cst_33 {dimension_numbers = #tpu.dot_dimension_numbers<[2], [1], [1], [2], [0, 0, 0, 1, 1, 2], [0], [0]>} : vector<2x8x8xbf16>, vector<2x8x32xbf16>, vector<2x8x32xf32> -> vector<2x8x32xf32>
    "tpu.trace_stop"() : () -> ()
    %102 = tpu.concatenate %44, %63, %82, %101 in 2 : vector<2x8x32xf32>, vector<2x8x32xf32>, vector<2x8x32xf32>, vector<2x8x32xf32> -> vector<2x8x128xf32>
    %103 = vector.shape_cast %102 : vector<2x8x128xf32> to vector<16x128xf32>
    %104 = arith.truncf %103 : vector<16x128xf32> to vector<16x128xbf16>
    %c0_34 = arith.constant 0 : index
    %c0_35 = arith.constant 0 : index
    %105 = vector.load %arg5[%c0_34, %c0_35] : memref<128x128xbf16, #tpu.memory_space<vmem>>, vector<128x128xbf16>
    %cst_36 = arith.constant dense<0.000000e+00> : vector<16x128xf32>
    %106 = tpu.matmul %104, %105, %cst_36 {dimension_numbers = #tpu.dot_dimension_numbers<[1], [0], [0], [1], [0, 0, 1, 1], [], []>} : vector<16x128xbf16>, vector<128x128xbf16>, vector<16x128xf32> -> vector<16x128xf32>
    %c3 = arith.constant 3 : index
    %c0_37 = arith.constant 0 : index
    %107 = vector.load %arg8[%c3, %c0_37] : memref<9x128xf32, #tpu.memory_space<vmem>>, vector<1x128xf32>
    %108 = vector.broadcast %107 : vector<1x128xf32> to vector<16x128xf32>
    %109 = arith.addf %106, %108 : vector<16x128xf32>
    %110 = arith.addf %22, %109 : vector<16x128xf32>
    %c5 = arith.constant 5 : index
    %c0_38 = arith.constant 0 : index
    %111 = vector.load %arg8[%c5, %c0_38] : memref<9x128xf32, #tpu.memory_space<vmem>>, vector<1x128xf32>
    %c6 = arith.constant 6 : index
    %c0_39 = arith.constant 0 : index
    %112 = vector.load %arg8[%c6, %c0_39] : memref<9x128xf32, #tpu.memory_space<vmem>>, vector<1x128xf32>
    %cst_40 = arith.constant dense<0.000000e+00> : vector<16xf32>
    %113 = vector.multi_reduction <add>, %110, %cst_40 [1] : vector<16x128xf32> to vector<16xf32>
    %114 = vector.shape_cast %113 : vector<16xf32> to vector<16x1xf32>
    %cst_41 = arith.constant 1.280000e+02 : f32
    %115 = vector.broadcast %cst_41 : f32 to vector<16x1xf32>
    %116 = arith.divf %114, %115 : vector<16x1xf32>
    %117 = vector.broadcast %116 : vector<16x1xf32> to vector<16x128xf32>
    %118 = arith.subf %110, %117 : vector<16x128xf32>
    %119 = arith.mulf %118, %118 : vector<16x128xf32>
    %cst_42 = arith.constant dense<0.000000e+00> : vector<16xf32>
    %120 = vector.multi_reduction <add>, %119, %cst_42 [1] : vector<16x128xf32> to vector<16xf32>
    %121 = vector.shape_cast %120 : vector<16xf32> to vector<16x1xf32>
    %cst_43 = arith.constant 1.280000e+02 : f32
    %122 = vector.broadcast %cst_43 : f32 to vector<16x1xf32>
    %123 = arith.divf %121, %122 : vector<16x1xf32>
    %124 = vector.broadcast %116 : vector<16x1xf32> to vector<16x128xf32>
    %125 = arith.subf %110, %124 : vector<16x128xf32>
    %cst_44 = arith.constant 9.99999997E-7 : f32
    %126 = vector.broadcast %cst_44 : f32 to vector<16x1xf32>
    %127 = arith.addf %123, %126 : vector<16x1xf32>
    %128 = math.rsqrt %127 : vector<16x1xf32>
    %129 = vector.broadcast %128 : vector<16x1xf32> to vector<16x128xf32>
    %130 = arith.mulf %125, %129 : vector<16x128xf32>
    %131 = vector.broadcast %111 : vector<1x128xf32> to vector<16x128xf32>
    %132 = arith.mulf %130, %131 : vector<16x128xf32>
    %133 = vector.broadcast %112 : vector<1x128xf32> to vector<16x128xf32>
    %134 = arith.addf %132, %133 : vector<16x128xf32>
    %135 = arith.truncf %134 : vector<16x128xf32> to vector<16x128xbf16>
    %c0_45 = arith.constant 0 : index
    %c0_46 = arith.constant 0 : index
    %136 = vector.load %arg6[%c0_45, %c0_46] : memref<128x256xbf16, #tpu.memory_space<vmem>>, vector<128x256xbf16>
    %cst_47 = arith.constant dense<0.000000e+00> : vector<16x256xf32>
    %137 = tpu.matmul %135, %136, %cst_47 {dimension_numbers = #tpu.dot_dimension_numbers<[1], [0], [0], [1], [0, 0, 1, 1], [], []>} : vector<16x128xbf16>, vector<128x256xbf16>, vector<16x256xf32> -> vector<16x256xf32>
    %c0_48 = arith.constant 0 : index
    %c0_49 = arith.constant 0 : index
    %138 = vector.load %arg9[%c0_48, %c0_49] : memref<1x256xf32, #tpu.memory_space<vmem>>, vector<1x256xf32>
    %139 = vector.broadcast %138 : vector<1x256xf32> to vector<16x256xf32>
    %140 = arith.addf %137, %139 : vector<16x256xf32>
    %cst_50 = arith.constant 0.000000e+00 : f32
    %141 = vector.broadcast %cst_50 : f32 to vector<16x256xf32>
    %142 = arith.maximumf %140, %141 : vector<16x256xf32>
    %143 = arith.truncf %142 : vector<16x256xf32> to vector<16x256xbf16>
    %c0_51 = arith.constant 0 : index
    %c0_52 = arith.constant 0 : index
    %144 = vector.load %arg7[%c0_51, %c0_52] : memref<256x128xbf16, #tpu.memory_space<vmem>>, vector<256x128xbf16>
    %cst_53 = arith.constant dense<0.000000e+00> : vector<16x128xf32>
    %145 = tpu.matmul %143, %144, %cst_53 {dimension_numbers = #tpu.dot_dimension_numbers<[1], [0], [0], [1], [0, 0, 1, 1], [], []>} : vector<16x256xbf16>, vector<256x128xbf16>, vector<16x128xf32> -> vector<16x128xf32>
    %c4 = arith.constant 4 : index
    %c0_54 = arith.constant 0 : index
    %146 = vector.load %arg8[%c4, %c0_54] : memref<9x128xf32, #tpu.memory_space<vmem>>, vector<1x128xf32>
    %147 = vector.broadcast %146 : vector<1x128xf32> to vector<16x128xf32>
    %148 = arith.addf %145, %147 : vector<16x128xf32>
    %149 = arith.addf %134, %148 : vector<16x128xf32>
    %c7 = arith.constant 7 : index
    %c0_55 = arith.constant 0 : index
    %150 = vector.load %arg8[%c7, %c0_55] : memref<9x128xf32, #tpu.memory_space<vmem>>, vector<1x128xf32>
    %c8 = arith.constant 8 : index
    %c0_56 = arith.constant 0 : index
    %151 = vector.load %arg8[%c8, %c0_56] : memref<9x128xf32, #tpu.memory_space<vmem>>, vector<1x128xf32>
    %cst_57 = arith.constant dense<0.000000e+00> : vector<16xf32>
    %152 = vector.multi_reduction <add>, %149, %cst_57 [1] : vector<16x128xf32> to vector<16xf32>
    %153 = vector.shape_cast %152 : vector<16xf32> to vector<16x1xf32>
    %cst_58 = arith.constant 1.280000e+02 : f32
    %154 = vector.broadcast %cst_58 : f32 to vector<16x1xf32>
    %155 = arith.divf %153, %154 : vector<16x1xf32>
    %156 = vector.broadcast %155 : vector<16x1xf32> to vector<16x128xf32>
    %157 = arith.subf %149, %156 : vector<16x128xf32>
    %158 = arith.mulf %157, %157 : vector<16x128xf32>
    %cst_59 = arith.constant dense<0.000000e+00> : vector<16xf32>
    %159 = vector.multi_reduction <add>, %158, %cst_59 [1] : vector<16x128xf32> to vector<16xf32>
    %160 = vector.shape_cast %159 : vector<16xf32> to vector<16x1xf32>
    %cst_60 = arith.constant 1.280000e+02 : f32
    %161 = vector.broadcast %cst_60 : f32 to vector<16x1xf32>
    %162 = arith.divf %160, %161 : vector<16x1xf32>
    %163 = vector.broadcast %155 : vector<16x1xf32> to vector<16x128xf32>
    %164 = arith.subf %149, %163 : vector<16x128xf32>
    %cst_61 = arith.constant 9.99999997E-7 : f32
    %165 = vector.broadcast %cst_61 : f32 to vector<16x1xf32>
    %166 = arith.addf %162, %165 : vector<16x1xf32>
    %167 = math.rsqrt %166 : vector<16x1xf32>
    %168 = vector.broadcast %167 : vector<16x1xf32> to vector<16x128xf32>
    %169 = arith.mulf %164, %168 : vector<16x128xf32>
    %170 = vector.broadcast %150 : vector<1x128xf32> to vector<16x128xf32>
    %171 = arith.mulf %169, %170 : vector<16x128xf32>
    %172 = vector.broadcast %151 : vector<1x128xf32> to vector<16x128xf32>
    %173 = arith.addf %171, %172 : vector<16x128xf32>
    %174 = vector.shape_cast %173 : vector<16x128xf32> to vector<2x8x128xf32>
    %c0_62 = arith.constant 0 : index
    %c0_63 = arith.constant 0 : index
    %c0_64 = arith.constant 0 : index
    %175 = vector.load %arg10[%c0_62, %c0_63, %c0_64] : memref<2x8x128xf32, #tpu.memory_space<vmem>>, vector<2x8x128xf32>
    tpu.vector_store %arg10[%c0_62, %c0_63, %c0_64], %174 {strides = array<i32>} : memref<2x8x128xf32, #tpu.memory_space<vmem>>, vector<2x8x128xf32>,
    return
  }
  func.func @transform_0(%arg0: i32) -> (i32, i32, i32) {
    %c0_i32 = arith.constant 0 : i32
    %c0_i32_0 = arith.constant 0 : i32
    %c0_i32_1 = arith.constant 0 : i32
    return %arg0, %c0_i32, %c0_i32_0 : i32, i32, i32
  }
  func.func @transform_1(%arg0: i32) -> (i32, i32, i32) {
    %c0_i32 = arith.constant 0 : i32
    %c0_i32_0 = arith.constant 0 : i32
    %c0_i32_1 = arith.constant 0 : i32
    return %arg0, %c0_i32, %c0_i32_0 : i32, i32, i32
  }
  func.func @transform_2(%arg0: i32) -> (i32, i32, i32) {
    %c0_i32 = arith.constant 0 : i32
    %c0_i32_0 = arith.constant 0 : i32
    %c0_i32_1 = arith.constant 0 : i32
    return %arg0, %c0_i32, %c0_i32_0 : i32, i32, i32
  }
  func.func @transform_3(%arg0: i32) -> (i32, i32) {
    %c0_i32 = arith.constant 0 : i32
    %c0_i32_0 = arith.constant 0 : i32
    %c0_i32_1 = arith.constant 0 : i32
    return %c0_i32, %c0_i32_0 : i32, i32
  }
  func.func @transform_4(%arg0: i32) -> (i32, i32) {
    %c0_i32 = arith.constant 0 : i32
    %c0_i32_0 = arith.constant 0 : i32
    %c0_i32_1 = arith.constant 0 : i32
    return %c0_i32, %c0_i32_0 : i32, i32
  }
  func.func @transform_5(%arg0: i32) -> (i32, i32) {
    %c0_i32 = arith.constant 0 : i32
    %c0_i32_0 = arith.constant 0 : i32
    %c0_i32_1 = arith.constant 0 : i32
    return %c0_i32, %c0_i32_0 : i32, i32
  }
  func.func @transform_6(%arg0: i32) -> (i32, i32) {
    %c0_i32 = arith.constant 0 : i32
    %c0_i32_0 = arith.constant 0 : i32
    %c0_i32_1 = arith.constant 0 : i32
    return %c0_i32, %c0_i32_0 : i32, i32
  }
  func.func @transform_7(%arg0: i32) -> (i32, i32) {
    %c0_i32 = arith.constant 0 : i32
    %c0_i32_0 = arith.constant 0 : i32
    %c0_i32_1 = arith.constant 0 : i32
    return %c0_i32, %c0_i32_0 : i32, i32
  }
  func.func @transform_8(%arg0: i32) -> (i32, i32) {
    %c0_i32 = arith.constant 0 : i32
    %c0_i32_0 = arith.constant 0 : i32
    %c0_i32_1 = arith.constant 0 : i32
    return %c0_i32, %c0_i32_0 : i32, i32
  }
  func.func @transform_9(%arg0: i32) -> (i32, i32, i32) {
    %c0_i32 = arith.constant 0 : i32
    %c0_i32_0 = arith.constant 0 : i32
    %c0_i32_1 = arith.constant 0 : i32
    return %arg0, %c0_i32, %c0_i32_0 : i32, i32, i32
  }
}

</mosaic_0001>

<llo_original>
// kernel: tpu_custom_call.1
$region0: #{tpu_custom_call.1}
  #allocation0 [shape = 'u32[]', space=smem, size = 0x4, offset = 0x4, fixed_abs, tag = 'smem constant byte address 0x4 - core index']
  #allocation1 [shape = 'u32[144,128]{1,0:T(1,128)}', space=vmem, size = 0x12000, scoped, tag = 'internal scratch']
  %s0 = inlined_call_operand.hbm [shape: bf16[2,8,128], index: 0, kind: input, shape index: {}]
  %s1 = inlined_call_operand.hbm [shape: bf16[2,8,128], index: 1, kind: input, shape index: {}]
  %s2 = inlined_call_operand.hbm [shape: bf16[2,8,128], index: 2, kind: input, shape index: {}]
  %s3 = inlined_call_operand.hbm [shape: bf16[128,384], index: 3, kind: input, shape index: {}]
  %s4 = inlined_call_operand.hbm [shape: bf16[128,128], index: 4, kind: input, shape index: {}]
  %s5 = inlined_call_operand.hbm [shape: bf16[128,256], index: 5, kind: input, shape index: {}]
  %s6 = inlined_call_operand.hbm [shape: bf16[256,128], index: 6, kind: input, shape index: {}]
  %s7 = inlined_call_operand.hbm [shape: f32[9,128], index: 7, kind: input, shape index: {}]
  %s8 = inlined_call_operand.vmem [shape: f32[1,256], index: 8, kind: input, shape index: {}]
  %s9 = inlined_call_operand.hbm [shape: f32[2,8,128], index: 9, kind: output, shape index: {}]
  %s10 = sld [smem:[#allocation0]]
  $region78: #{tpu_custom_call.1} parent=0
    _
  %s12 = ssub.s32 1, %s10
  %s13 = scalar_select 0, %s12, %s10
  $region1: #{tpu_custom_call.1} parent=0
    #allocation2 [shape = 'u8[4096]{0}', space=vmem, size = 0x1000, scoped, tag = 'input window, operand 0, single buffered']
    #allocation3 [shape = 's32[1]{0}', space=sflag, size = 0x4, scoped, tag = 'scoped memory for tpu_custom_call.1']
    #allocation4 [shape = 's32[1]{0}', space=sflag, size = 0x4, scoped, tag = 'scoped memory for tpu_custom_call.1']
    #allocation5 [shape = 'u8[4096]{0}', space=vmem, size = 0x1000, scoped, tag = 'input window, operand 1, single buffered']
    #allocation6 [shape = 's32[1]{0}', space=sflag, size = 0x4, scoped, tag = 'scoped memory for tpu_custom_call.1']
    #allocation7 [shape = 'u8[4096]{0}', space=vmem, size = 0x1000, scoped, tag = 'input window, operand 2, single buffered']
    #allocation8 [shape = 'u8[98304]{0}', space=vmem, size = 0x18000, scoped, tag = 'input window, operand 3, single buffered']
    #allocation9 [shape = 's32[1]{0}', space=sflag, size = 0x4, scoped, tag = 'scoped memory for tpu_custom_call.1']
    #allocation10 [shape = 'u8[32768]{0}', space=vmem, size = 0x8000, scoped, tag = 'input window, operand 4, single buffered']
    #allocation11 [shape = 'u8[65536]{0}', space=vmem, size = 0x10000, scoped, tag = 'input window, operand 5, single buffered']
    #allocation12 [shape = 's32[1]{0}', space=sflag, size = 0x4, scoped, tag = 'scoped memory for tpu_custom_call.1']
    #allocation13 [shape = 'u8[65536]{0}', space=vmem, size = 0x10000, scoped, tag = 'input window, operand 6, single buffered']
    #allocation14 [shape = 'u8[8192]{0}', space=vmem, size = 0x2000, scoped, tag = 'input window, operand 7, single buffered']
    #allocation15 [shape = 's32[1]{0}', space=sflag, size = 0x4, scoped, tag = 'scoped memory for tpu_custom_call.1']
    #allocation16 [shape = 'u8[8192]{0}', space=vmem, size = 0x2000, scoped, tag = 'output window, operand 0, single buffered']
    %14 = vsyncpa [#allocation3], 0
    %15 = vsyncpa [#allocation6], 0
    %16 = vsyncpa [#allocation9], 0
    %17 = vsyncpa [#allocation12], 0
    %18 = vsyncpa [#allocation15], 0
    %19 = vsyncpa [#allocation4], 0
    // Predicated region
    $region2: #{tpu_custom_call.1} parent=1 // pred_check
      _
    $region3: #{tpu_custom_call.1} parent=1 // pred_check_branch
      %21 = sbr.rel (0) target = $region5
    $region4: #{tpu_custom_call.1} parent=1 // pred_region
      %s23 = ssub.s32 128, 128
      %24 = vsyncadd [#allocation3], %s23
      %s25 = sshll.u32 [#allocation2], 4
      %s26 = int_to_ptr.vmem [resolvable:$true] %s25
      %31 = dma.hbm_to_vmem [thread:$0]  %s0, 128, %s26, [#allocation3], 64, 64, 4
    $region5: #{tpu_custom_call.1} parent=1 // pred_fallthru
      _
    // Predicated region
    $region6: #{tpu_custom_call.1} parent=1 // pred_check
      _
    $region7: #{tpu_custom_call.1} parent=1 // pred_check_branch
      %33 = sbr.rel (0) target = $region9
    $region8: #{tpu_custom_call.1} parent=1 // pred_region
      %s35 = ssub.s32 128, 128
      %36 = vsyncadd [#allocation6], %s35
      %s37 = sshll.u32 [#allocation5], 4
      %s38 = int_to_ptr.vmem [resolvable:$true] %s37
      %43 = dma.hbm_to_vmem [thread:$0]  %s1, 128, %s38, [#allocation6], 64, 64, 4
    $region9: #{tpu_custom_call.1} parent=1 // pred_fallthru
      _
    // Predicated region
    $region10: #{tpu_custom_call.1} parent=1 // pred_check
      _
    $region11: #{tpu_custom_call.1} parent=1 // pred_check_branch
      %45 = sbr.rel (0) target = $region13
    $region12: #{tpu_custom_call.1} parent=1 // pred_region
      %s47 = ssub.s32 128, 128
      %48 = vsyncadd [#allocation6], %s47
      %s49 = sshll.u32 [#allocation7], 4
      %s50 = int_to_ptr.vmem [resolvable:$true] %s49
      %55 = dma.hbm_to_vmem [thread:$0]  %s2, 128, %s50, [#allocation6], 64, 64, 4
    $region13: #{tpu_custom_call.1} parent=1 // pred_fallthru
      _
    // Predicated region
    $region14: #{tpu_custom_call.1} parent=1 // pred_check
      _
    $region15: #{tpu_custom_call.1} parent=1 // pred_check_branch
      %57 = sbr.rel (0) target = $region17
    $region16: #{tpu_custom_call.1} parent=1 // pred_region
      %s59 = ssub.s32 3072, 3072
      %60 = vsyncadd [#allocation9], %s59
      %s61 = sshll.u32 [#allocation8], 4
      %s62 = int_to_ptr.vmem [resolvable:$true] %s61
      %67 = dma.hbm_to_vmem [thread:$0]  %s3, 3072, %s62, [#allocation9], 192, 192, 12
    $region17: #{tpu_custom_call.1} parent=1 // pred_fallthru
      _
    // Predicated region
    $region18: #{tpu_custom_call.1} parent=1 // pred_check
      _
    $region19: #{tpu_custom_call.1} parent=1 // pred_check_branch
      %69 = sbr.rel (0) target = $region21
    $region20: #{tpu_custom_call.1} parent=1 // pred_region
      %s71 = ssub.s32 1024, 1024
      %72 = vsyncadd [#allocation9], %s71
      %s73 = sshll.u32 [#allocation10], 4
      %s74 = int_to_ptr.vmem [resolvable:$true] %s73
      %79 = dma.hbm_to_vmem [thread:$0]  %s4, 1024, %s74, [#allocation9], 64, 64, 4
    $region21: #{tpu_custom_call.1} parent=1 // pred_fallthru
      _
    // Predicated region
    $region22: #{tpu_custom_call.1} parent=1 // pred_check
      _
    $region23: #{tpu_custom_call.1} parent=1 // pred_check_branch
      %81 = sbr.rel (0) target = $region25
    $region24: #{tpu_custom_call.1} parent=1 // pred_region
      %s83 = ssub.s32 2048, 2048
      %84 = vsyncadd [#allocation12], %s83
      %s85 = sshll.u32 [#allocation11], 4
      %s86 = int_to_ptr.vmem [resolvable:$true] %s85
      %91 = dma.hbm_to_vmem [thread:$0]  %s5, 2048, %s86, [#allocation12], 128, 128, 8
    $region25: #{tpu_custom_call.1} parent=1 // pred_fallthru
      _
    // Predicated region
    $region26: #{tpu_custom_call.1} parent=1 // pred_check
      _
    $region27: #{tpu_custom_call.1} parent=1 // pred_check_branch
      %93 = sbr.rel (0) target = $region29
    $region28: #{tpu_custom_call.1} parent=1 // pred_region
      %s95 = ssub.s32 2048, 2048
      %96 = vsyncadd [#allocation12], %s95
      %s97 = sshll.u32 [#allocation13], 4
      %s98 = int_to_ptr.vmem [resolvable:$true] %s97
      %103 = dma.hbm_to_vmem [thread:$0]  %s6, 2048, %s98, [#allocation12], 64, 64, 4
    $region29: #{tpu_custom_call.1} parent=1 // pred_fallthru
      _
    // Predicated region
    $region30: #{tpu_custom_call.1} parent=1 // pred_check
      _
    $region31: #{tpu_custom_call.1} parent=1 // pred_check_branch
      %105 = sbr.rel (0) target = $region33
    $region32: #{tpu_custom_call.1} parent=1 // pred_region
      %s107 = ssub.s32 256, 256
      %108 = vsyncadd [#allocation15], %s107
      %s109 = sshll.u32 [#allocation14], 4
      %s110 = int_to_ptr.vmem [resolvable:$true] %s109
      %115 = dma.hbm_to_vmem [thread:$0]  %s7, 256, %s110, [#allocation15], 128, 128, 8
    $region33: #{tpu_custom_call.1} parent=1 // pred_fallthru
      _
    // Predicated region
    $region34: #{tpu_custom_call.1} parent=1 // pred_check
      _
    $region35: #{tpu_custom_call.1} parent=1 // pred_check_branch
      %117 = sbr.rel (0) target = $region37
    $region36: #{tpu_custom_call.1} parent=1 // pred_region
      _
    $region37: #{tpu_custom_call.1} parent=1 // pred_fallthru
      _
    // Predicated region
    $region38: #{tpu_custom_call.1} parent=1 // pred_check
      _
    $region39: #{tpu_custom_call.1} parent=1 // pred_check_branch
      %119 = sbr.rel (0) target = $region41
    $region40: #{tpu_custom_call.1} parent=1 // pred_region
      %120 = dma.done [#allocation3], 128
    $region41: #{tpu_custom_call.1} parent=1 // pred_fallthru
      _
    // Predicated region
    $region42: #{tpu_custom_call.1} parent=1 // pred_check
      _
    $region43: #{tpu_custom_call.1} parent=1 // pred_check_branch
      %122 = sbr.rel (0) target = $region45
    $region44: #{tpu_custom_call.1} parent=1 // pred_region
      %123 = dma.done [#allocation6], 128
    $region45: #{tpu_custom_call.1} parent=1 // pred_fallthru
      _
    // Predicated region
    $region46: #{tpu_custom_call.1} parent=1 // pred_check
      _
    $region47: #{tpu_custom_call.1} parent=1 // pred_check_branch
      %125 = sbr.rel (0) target = $region49
    $region48: #{tpu_custom_call.1} parent=1 // pred_region
      %126 = dma.done [#allocation6], 128
    $region49: #{tpu_custom_call.1} parent=1 // pred_fallthru
      _
    // Predicated region
    $region50: #{tpu_custom_call.1} parent=1 // pred_check
      _
    $region51: #{tpu_custom_call.1} parent=1 // pred_check_branch
      %128 = sbr.rel (0) target = $region53
    $region52: #{tpu_custom_call.1} parent=1 // pred_region
      %129 = dma.done [#allocation9], 3072
    $region53: #{tpu_custom_call.1} parent=1 // pred_fallthru
      _
    // Predicated region
    $region54: #{tpu_custom_call.1} parent=1 // pred_check
      _
    $region55: #{tpu_custom_call.1} parent=1 // pred_check_branch
      %131 = sbr.rel (0) target = $region57
    $region56: #{tpu_custom_call.1} parent=1 // pred_region
      %132 = dma.done [#allocation9], 1024
    $region57: #{tpu_custom_call.1} parent=1 // pred_fallthru
      _
    // Predicated region
    $region58: #{tpu_custom_call.1} parent=1 // pred_check
      _
    $region59: #{tpu_custom_call.1} parent=1 // pred_check_branch
      %134 = sbr.rel (0) target = $region61
    $region60: #{tpu_custom_call.1} parent=1 // pred_region
      %135 = dma.done [#allocation12], 2048
    $region61: #{tpu_custom_call.1} parent=1 // pred_fallthru
      _
    // Predicated region
    $region62: #{tpu_custom_call.1} parent=1 // pred_check
      _
    $region63: #{tpu_custom_call.1} parent=1 // pred_check_branch
      %137 = sbr.rel (0) target = $region65
    $region64: #{tpu_custom_call.1} parent=1 // pred_region
      %138 = dma.done [#allocation12], 2048
    $region65: #{tpu_custom_call.1} parent=1 // pred_fallthru
      _
    // Predicated region
    $region66: #{tpu_custom_call.1} parent=1 // pred_check
      _
    $region67: #{tpu_custom_call.1} parent=1 // pred_check_branch
      %140 = sbr.rel (0) target = $region69
    $region68: #{tpu_custom_call.1} parent=1 // pred_region
      %141 = dma.done [#allocation15], 256
    $region69: #{tpu_custom_call.1} parent=1 // pred_fallthru
      _
    %v143 = vld [vmem:[#allocation2] sm:$0xf]
    %v144 = vld [vmem:[#allocation2 + $0x4] sm:$0xf]
    %v145 = vld [vmem:[#allocation5] sm:$0xf]
    %v146 = vld [vmem:[#allocation5 + $0x4] sm:$0xf]
    %v147 = vld [vmem:[#allocation7] sm:$0xf]
    %v148 = vld [vmem:[#allocation7 + $0x4] sm:$0xf]
    %v149 = vld [vmem:[#allocation8] sm:$0xf]
    %v150 = vld [vmem:[#allocation8 + $0xc] sm:$0xf]
    %v151 = vld [vmem:[#allocation8 + $0x18] sm:$0xf]
    %v152 = vld [vmem:[#allocation8 + $0x24] sm:$0xf]
    %v153 = vld [vmem:[#allocation8 + $0x30] sm:$0xf]
    %v154 = vld [vmem:[#allocation8 + $0x3c] sm:$0xf]
    %v155 = vld [vmem:[#allocation8 + $0x48] sm:$0xf]
    %v156 = vld [vmem:[#allocation8 + $0x54] sm:$0xf]
    %v157 = vld [vmem:[#allocation8 + $0x60] sm:$0xf]
    %v158 = vld [vmem:[#allocation8 + $0x6c] sm:$0xf]
    %v159 = vld [vmem:[#allocation8 + $0x78] sm:$0xf]
    %v160 = vld [vmem:[#allocation8 + $0x84] sm:$0xf]
    %v161 = vld [vmem:[#allocation8 + $0x90] sm:$0xf]
    %v162 = vld [vmem:[#allocation8 + $0x9c] sm:$0xf]
    %v163 = vld [vmem:[#allocation8 + $0xa8] sm:$0xf]
    %v164 = vld [vmem:[#allocation8 + $0xb4] sm:$0xf]
    %v165 = vld [vmem:[#allocation14] sm:$0x1]
    %v166 = vlaneseq
    %v167 = vshrl.u32 %v166, 7
    %v168 = vsub.s32 0, %v167
    %v169 = vrot.slane %v165, %v168
    %v172 = vunpack.c.l.b16 %v143
    %v173 = vunpack.c.l.b16 %v144
    %v174 = vpack.c.b16 %v173, %v172
    %v192 = vunpack.c.l.b16 %v149
    %v193 = vunpack.c.l.b16 %v150
    %v194 = vunpack.c.l.b16 %v151
    %v195 = vunpack.c.l.b16 %v152
    %v196 = vunpack.c.l.b16 %v153
    %v197 = vunpack.c.l.b16 %v154
    %v198 = vunpack.c.l.b16 %v155
    %v199 = vunpack.c.l.b16 %v156
    %v200 = vunpack.c.l.b16 %v157
    %v201 = vunpack.c.l.b16 %v158
    %v202 = vunpack.c.l.b16 %v159
    %v203 = vunpack.c.l.b16 %v160
    %v204 = vunpack.c.l.b16 %v161
    %v205 = vunpack.c.l.b16 %v162
    %v206 = vunpack.c.l.b16 %v163
    %v207 = vunpack.c.l.b16 %v164
    %v208 = vpack.c.b16 %v193, %v192
    %v209 = vpack.c.b16 %v195, %v194
    %v210 = vpack.c.b16 %v197, %v196
    %v211 = vpack.c.b16 %v199, %v198
    %v212 = vpack.c.b16 %v201, %v200
    %v213 = vpack.c.b16 %v203, %v202
    %v214 = vpack.c.b16 %v205, %v204
    %v215 = vpack.c.b16 %v207, %v206
    %224 = vmatprep.subr.bf16.mxu0 0
    %225 = vmatpush1.bf16.msra.mxu0 %v215
    %226 = vmatprep.subr.bf16.mxu0 0
    %227 = vmatpush1.bf16.msra.mxu0 %v214
    %228 = vmatprep.subr.bf16.mxu0 0
    %229 = vmatpush1.bf16.msra.mxu0 %v213
    %230 = vmatprep.subr.bf16.mxu0 0
    %231 = vmatpush1.bf16.msra.mxu0 %v212
    %232 = vmatprep.subr.bf16.mxu0 0
    %233 = vmatpush1.bf16.msra.mxu0 %v211
    %234 = vmatprep.subr.bf16.mxu0 0
    %235 = vmatpush1.bf16.msra.mxu0 %v210
    %236 = vmatprep.subr.bf16.mxu0 0
    %237 = vmatpush1.bf16.msra.mxu0 %v209
    %238 = vmatprep.subr.bf16.mxu0 0
    %239 = vmatpush1.bf16.msra.mxu0 %v208
    %240 = vmatprep.subr.bf16.mxu0 0
    %241 = vmatpush2.bf16.msra.mxu0 0
    %242 = vmatprep.subr.bf16.mxu0 0
    %243 = vmatpush2.bf16.msra.mxu0 0
    %244 = vmatprep.subr.bf16.mxu0 0
    %245 = vmatpush2.bf16.msra.mxu0 0
    %246 = vmatprep.subr.bf16.mxu0 0
    %247 = vmatpush2.bf16.msra.mxu0 0
    %248 = vmatprep.subr.bf16.mxu0 0
    %249 = vmatpush2.bf16.msra.mxu0 0
    %250 = vmatprep.subr.bf16.mxu0 0
    %251 = vmatpush2.bf16.msra.mxu0 0
    %252 = vmatprep.subr.bf16.mxu0 0
    %253 = vmatpush2.bf16.msra.mxu0 0
    %254 = vmatprep.subr.bf16.mxu0 0
    %255 = vmatpush2.bf16.msra.mxu0 0
    %256 = vmatprep.mubr.bf16.mxu0 0
    %257 = vmatmul.mubr.bf16.gmra.mxu0 %v174
    %v258 = vpop.f32.mrf.mxu0
    %v259 = vadd.f32 %v169, %v258
    %v260 = vpop.f32.mrf.mxu0
    %v261 = vpop.f32.mrf.mxu0
    %v262 = vadd.f32 %v169, %v261
    %v263 = vpop.f32.mrf.mxu0
    %264 = vdwg.mxu0
    %v265 = vld [vmem:[#allocation8 + $0x4] sm:$0xf]
    %v266 = vld [vmem:[#allocation8 + $0x10] sm:$0xf]
    %v267 = vld [vmem:[#allocation8 + $0x1c] sm:$0xf]
    %v268 = vld [vmem:[#allocation8 + $0x28] sm:$0xf]
    %v269 = vld [vmem:[#allocation8 + $0x34] sm:$0xf]
    %v270 = vld [vmem:[#allocation8 + $0x40] sm:$0xf]
    %v271 = vld [vmem:[#allocation8 + $0x4c] sm:$0xf]
    %v272 = vld [vmem:[#allocation8 + $0x58] sm:$0xf]
    %v273 = vld [vmem:[#allocation8 + $0x64] sm:$0xf]
    %v274 = vld [vmem:[#allocation8 + $0x70] sm:$0xf]
    %v275 = vld [vmem:[#allocation8 + $0x7c] sm:$0xf]
    %v276 = vld [vmem:[#allocation8 + $0x88] sm:$0xf]
    %v277 = vld [vmem:[#allocation8 + $0x94] sm:$0xf]
    %v278 = vld [vmem:[#allocation8 + $0xa0] sm:$0xf]
    %v279 = vld [vmem:[#allocation8 + $0xac] sm:$0xf]
    %v280 = vld [vmem:[#allocation8 + $0xb8] sm:$0xf]
    %v281 = vld [vmem:[#allocation14 + $0x1] sm:$0x1]
    %v282 = vlaneseq
    %v283 = vshrl.u32 %v282, 7
    %v284 = vsub.s32 0, %v283
    %v285 = vrot.slane %v281, %v284
    %v288 = vunpack.c.l.b16 %v145
    %v289 = vunpack.c.l.b16 %v146
    %v290 = vpack.c.b16 %v289, %v288
    %v308 = vunpack.c.l.b16 %v265
    %v309 = vunpack.c.l.b16 %v266
    %v310 = vunpack.c.l.b16 %v267
    %v311 = vunpack.c.l.b16 %v268
    %v312 = vunpack.c.l.b16 %v269
    %v313 = vunpack.c.l.b16 %v270
    %v314 = vunpack.c.l.b16 %v271
    %v315 = vunpack.c.l.b16 %v272
    %v316 = vunpack.c.l.b16 %v273
    %v317 = vunpack.c.l.b16 %v274
    %v318 = vunpack.c.l.b16 %v275
    %v319 = vunpack.c.l.b16 %v276
    %v320 = vunpack.c.l.b16 %v277
    %v321 = vunpack.c.l.b16 %v278
    %v322 = vunpack.c.l.b16 %v279
    %v323 = vunpack.c.l.b16 %v280
    %v324 = vpack.c.b16 %v309, %v308
    %v325 = vpack.c.b16 %v311, %v310
    %v326 = vpack.c.b16 %v313, %v312
    %v327 = vpack.c.b16 %v315, %v314
    %v328 = vpack.c.b16 %v317, %v316
    %v329 = vpack.c.b16 %v319, %v318
    %v330 = vpack.c.b16 %v321, %v320
    %v331 = vpack.c.b16 %v323, %v322
    %340 = vmatprep.subr.bf16.mxu0 0
    %341 = vmatpush1.bf16.msra.mxu0 %v331
    %342 = vmatprep.subr.bf16.mxu0 0
    %343 = vmatpush1.bf16.msra.mxu0 %v330
    %344 = vmatprep.subr.bf16.mxu0 0
    %345 = vmatpush1.bf16.msra.mxu0 %v329
    %346 = vmatprep.subr.bf16.mxu0 0
    %347 = vmatpush1.bf16.msra.mxu0 %v328
    %348 = vmatprep.subr.bf16.mxu0 0
    %349 = vmatpush1.bf16.msra.mxu0 %v327
    %350 = vmatprep.subr.bf16.mxu0 0
    %351 = vmatpush1.bf16.msra.mxu0 %v326
    %352 = vmatprep.subr.bf16.mxu0 0
    %353 = vmatpush1.bf16.msra.mxu0 %v325
    %354 = vmatprep.subr.bf16.mxu0 0
    %355 = vmatpush1.bf16.msra.mxu0 %v324
    %356 = vmatprep.subr.bf16.mxu0 0
    %357 = vmatpush2.bf16.msra.mxu0 0
    %358 = vmatprep.subr.bf16.mxu0 0
    %359 = vmatpush2.bf16.msra.mxu0 0
    %360 = vmatprep.subr.bf16.mxu0 0
    %361 = vmatpush2.bf16.msra.mxu0 0
    %362 = vmatprep.subr.bf16.mxu0 0
    %363 = vmatpush2.bf16.msra.mxu0 0
    %364 = vmatprep.subr.bf16.mxu0 0
    %365 = vmatpush2.bf16.msra.mxu0 0
    %366 = vmatprep.subr.bf16.mxu0 0
    %367 = vmatpush2.bf16.msra.mxu0 0
    %368 = vmatprep.subr.bf16.mxu0 0
    %369 = vmatpush2.bf16.msra.mxu0 0
    %370 = vmatprep.subr.bf16.mxu0 0
    %371 = vmatpush2.bf16.msra.mxu0 0
    %372 = vmatprep.mubr.bf16.mxu0 0
    %373 = vmatmul.mubr.bf16.gmra.mxu0 %v290
    %v374 = vpop.f32.mrf.mxu0
    %v375 = vadd.f32 %v285, %v374
    %v376 = vpop.f32.mrf.mxu0
    %v377 = vpop.f32.mrf.mxu0
    %v378 = vadd.f32 %v285, %v377
    %v379 = vpop.f32.mrf.mxu0
    %380 = vdwg.mxu0
    %v381 = vld [vmem:[#allocation8 + $0x8] sm:$0xf]
    %v382 = vld [vmem:[#allocation8 + $0x14] sm:$0xf]
    %v383 = vld [vmem:[#allocation8 + $0x20] sm:$0xf]
    %v384 = vld [vmem:[#allocation8 + $0x2c] sm:$0xf]
    %v385 = vld [vmem:[#allocation8 + $0x38] sm:$0xf]
    %v386 = vld [vmem:[#allocation8 + $0x44] sm:$0xf]
    %v387 = vld [vmem:[#allocation8 + $0x50] sm:$0xf]
    %v388 = vld [vmem:[#allocation8 + $0x5c] sm:$0xf]
    %v389 = vld [vmem:[#allocation8 + $0x68] sm:$0xf]
    %v390 = vld [vmem:[#allocation8 + $0x74] sm:$0xf]
    %v391 = vld [vmem:[#allocation8 + $0x80] sm:$0xf]
    %v392 = vld [vmem:[#allocation8 + $0x8c] sm:$0xf]
    %v393 = vld [vmem:[#allocation8 + $0x98] sm:$0xf]
    %v394 = vld [vmem:[#allocation8 + $0xa4] sm:$0xf]
    %v395 = vld [vmem:[#allocation8 + $0xb0] sm:$0xf]
    %v396 = vld [vmem:[#allocation8 + $0xbc] sm:$0xf]
    %v397 = vld [vmem:[#allocation14 + $0x2] sm:$0x1]
    %v398 = vlaneseq
    %v399 = vshrl.u32 %v398, 7
    %v400 = vsub.s32 0, %v399
    %v401 = vrot.slane %v397, %v400
    %v404 = vunpack.c.l.b16 %v147
    %v405 = vunpack.c.l.b16 %v148
    %v406 = vpack.c.b16 %v405, %v404
    %v424 = vunpack.c.l.b16 %v381
    %v425 = vunpack.c.l.b16 %v382
    %v426 = vunpack.c.l.b16 %v383
    %v427 = vunpack.c.l.b16 %v384
    %v428 = vunpack.c.l.b16 %v385
    %v429 = vunpack.c.l.b16 %v386
    %v430 = vunpack.c.l.b16 %v387
    %v431 = vunpack.c.l.b16 %v388
    %v432 = vunpack.c.l.b16 %v389
    %v433 = vunpack.c.l.b16 %v390
    %v434 = vunpack.c.l.b16 %v391
    %v435 = vunpack.c.l.b16 %v392
    %v436 = vunpack.c.l.b16 %v393
    %v437 = vunpack.c.l.b16 %v394
    %v438 = vunpack.c.l.b16 %v395
    %v439 = vunpack.c.l.b16 %v396
    %v440 = vpack.c.b16 %v425, %v424
    %v441 = vpack.c.b16 %v427, %v426
    %v442 = vpack.c.b16 %v429, %v428
    %v443 = vpack.c.b16 %v431, %v430
    %v444 = vpack.c.b16 %v433, %v432
    %v445 = vpack.c.b16 %v435, %v434
    %v446 = vpack.c.b16 %v437, %v436
    %v447 = vpack.c.b16 %v439, %v438
    %456 = vmatprep.subr.bf16.mxu0 0
    %457 = vmatpush1.bf16.msra.mxu0 %v447
    %458 = vmatprep.subr.bf16.mxu0 0
    %459 = vmatpush1.bf16.msra.mxu0 %v446
    %460 = vmatprep.subr.bf16.mxu0 0
    %461 = vmatpush1.bf16.msra.mxu0 %v445
    %462 = vmatprep.subr.bf16.mxu0 0
    %463 = vmatpush1.bf16.msra.mxu0 %v444
    %464 = vmatprep.subr.bf16.mxu0 0
    %465 = vmatpush1.bf16.msra.mxu0 %v443
    %466 = vmatprep.subr.bf16.mxu0 0
    %467 = vmatpush1.bf16.msra.mxu0 %v442
    %468 = vmatprep.subr.bf16.mxu0 0
    %469 = vmatpush1.bf16.msra.mxu0 %v441
    %470 = vmatprep.subr.bf16.mxu0 0
    %471 = vmatpush1.bf16.msra.mxu0 %v440
    %472 = vmatprep.subr.bf16.mxu0 0
    %473 = vmatpush2.bf16.msra.mxu0 0
    %474 = vmatprep.subr.bf16.mxu0 0
    %475 = vmatpush2.bf16.msra.mxu0 0
    %476 = vmatprep.subr.bf16.mxu0 0
    %477 = vmatpush2.bf16.msra.mxu0 0
    %478 = vmatprep.subr.bf16.mxu0 0
    %479 = vmatpush2.bf16.msra.mxu0 0
    %480 = vmatprep.subr.bf16.mxu0 0
    %481 = vmatpush2.bf16.msra.mxu0 0
    %482 = vmatprep.subr.bf16.mxu0 0
    %483 = vmatpush2.bf16.msra.mxu0 0
    %484 = vmatprep.subr.bf16.mxu0 0
    %485 = vmatpush2.bf16.msra.mxu0 0
    %486 = vmatprep.subr.bf16.mxu0 0
    %487 = vmatpush2.bf16.msra.mxu0 0
    %488 = vmatprep.mubr.bf16.mxu0 0
    %489 = vmatmul.mubr.bf16.gmra.mxu0 %v406
    %v490 = vpop.f32.mrf.mxu0
    %v491 = vadd.f32 %v401, %v490
    %v492 = vpop.f32.mrf.mxu0
    %v493 = vpop.f32.mrf.mxu0
    %v494 = vadd.f32 %v401, %v493
    %v495 = vpop.f32.mrf.mxu0
    %496 = vdwg.mxu0
    %v497 = vunpack.c.l.bf16 %v143
    %v498 = vunpack.c.l.bf16 %v144
    %v499 = vpack.c.bf16 %v259, %v259
    %v500 = vpack.c.bf16 %v262, %v262
    %v501 = vpack.c.bf16 %v375, %v375
    %v502 = vpack.c.bf16 %v378, %v378
    %v503 = vpack.c.bf16 %v491, %v491
    %v504 = vpack.c.bf16 %v494, %v494
    %vm505 = vcmask 261120
    %v507 = vsel %vm505, %v499, 0
    %v510 = vsel %vm505, %v501, 0
    %512 = vmatprep.subr.bf16.mxu0 0
    %513 = vmatpush1.bf16.xpose.msra.mxu0 0
    %514 = vmatprep.subr.bf16.mxu0 0
    %515 = vmatpush1.bf16.xpose.msra.mxu0 0
    %516 = vmatprep.subr.bf16.mxu0 0
    %517 = vmatpush1.bf16.xpose.msra.mxu0 0
    %518 = vmatprep.subr.bf16.mxu0 0
    %519 = vmatpush1.bf16.xpose.msra.mxu0 0
    %520 = vmatprep.subr.bf16.mxu0 0
    %521 = vmatpush1.bf16.xpose.msra.mxu0 0
    %522 = vmatprep.subr.bf16.mxu0 0
    %523 = vmatpush1.bf16.xpose.msra.mxu0 0
    %524 = vmatprep.subr.bf16.mxu0 0
    %525 = vmatpush1.bf16.xpose.msra.mxu0 0
    %526 = vmatprep.subr.bf16.mxu0 0
    %527 = vmatpush1.bf16.xpose.msra.mxu0 %v510
    %528 = vmatprep.subr.bf16.mxu0 0
    %529 = vmatpush2.bf16.xpose.msra.mxu0 0
    %530 = vmatprep.subr.bf16.mxu0 0
    %531 = vmatpush2.bf16.xpose.msra.mxu0 0
    %532 = vmatprep.subr.bf16.mxu0 0
    %533 = vmatpush2.bf16.xpose.msra.mxu0 0
    %534 = vmatprep.subr.bf16.mxu0 0
    %535 = vmatpush2.bf16.xpose.msra.mxu0 0
    %536 = vmatprep.subr.bf16.mxu0 0
    %537 = vmatpush2.bf16.xpose.msra.mxu0 0
    %538 = vmatprep.subr.bf16.mxu0 0
    %539 = vmatpush2.bf16.xpose.msra.mxu0 0
    %540 = vmatprep.subr.bf16.mxu0 0
    %541 = vmatpush2.bf16.xpose.msra.mxu0 0
    %542 = vmatprep.subr.bf16.mxu0 0
    %543 = vmatpush2.bf16.xpose.msra.mxu0 0
    %544 = vmatprep.mubr.bf16.mxu0 0
    %545 = vmatmul.mubr.bf16.gmra.mxu0 %v507
    %v546 = vpop.f32.mrf.mxu0
    %v547 = vadd.f32 0.0, %v546
    %v548 = vpop.f32.mrf.mxu0
    %v549 = vpop.f32.mrf.mxu0
    %v550 = vpop.f32.mrf.mxu0
    %551 = vdwg.mxu0
    %v553 = vsel %vm505, %v500, 0
    %v556 = vsel %vm505, %v502, 0
    %558 = vmatprep.subr.bf16.mxu0 0
    %559 = vmatpush1.bf16.xpose.msra.mxu0 0
    %560 = vmatprep.subr.bf16.mxu0 0
    %561 = vmatpush1.bf16.xpose.msra.mxu0 0
    %562 = vmatprep.subr.bf16.mxu0 0
    %563 = vmatpush1.bf16.xpose.msra.mxu0 0
    %564 = vmatprep.subr.bf16.mxu0 0
    %565 = vmatpush1.bf16.xpose.msra.mxu0 0
    %566 = vmatprep.subr.bf16.mxu0 0
    %567 = vmatpush1.bf16.xpose.msra.mxu0 0
    %568 = vmatprep.subr.bf16.mxu0 0
    %569 = vmatpush1.bf16.xpose.msra.mxu0 0
    %570 = vmatprep.subr.bf16.mxu0 0
    %571 = vmatpush1.bf16.xpose.msra.mxu0 0
    %572 = vmatprep.subr.bf16.mxu0 0
    %573 = vmatpush1.bf16.xpose.msra.mxu0 %v556
    %574 = vmatprep.subr.bf16.mxu0 0
    %575 = vmatpush2.bf16.xpose.msra.mxu0 0
    %576 = vmatprep.subr.bf16.mxu0 0
    %577 = vmatpush2.bf16.xpose.msra.mxu0 0
    %578 = vmatprep.subr.bf16.mxu0 0
    %579 = vmatpush2.bf16.xpose.msra.mxu0 0
    %580 = vmatprep.subr.bf16.mxu0 0
    %581 = vmatpush2.bf16.xpose.msra.mxu0 0
    %582 = vmatprep.subr.bf16.mxu0 0
    %583 = vmatpush2.bf16.xpose.msra.mxu0 0
    %584 = vmatprep.subr.bf16.mxu0 0
    %585 = vmatpush2.bf16.xpose.msra.mxu0 0
    %586 = vmatprep.subr.bf16.mxu0 0
    %587 = vmatpush2.bf16.xpose.msra.mxu0 0
    %588 = vmatprep.subr.bf16.mxu0 0
    %589 = vmatpush2.bf16.xpose.msra.mxu0 0
    %590 = vmatprep.mubr.bf16.mxu0 0
    %591 = vmatmul.mubr.bf16.gmra.mxu0 %v553
    %v592 = vpop.f32.mrf.mxu0
    %v593 = vadd.f32 0.0, %v592
    %v594 = vpop.f32.mrf.mxu0
    %v595 = vpop.f32.mrf.mxu0
    %v596 = vpop.f32.mrf.mxu0
    %597 = vdwg.mxu0
    %vm598 = vcmask 64512
    %v599 = vsel %vm598, %v547, -inf
    %600 = vmax.xlane.f32.xlu0 %v599
    %v601 = vpop.xlane.xlu0 %600
    %v602 = vsel %vm598, %v593, -inf
    %603 = vmax.xlane.f32.xlu0 %v602
    %v604 = vpop.xlane.xlu0 %603
    %v605 = vsub.f32 %v547, %v601
    %v606 = vsub.f32 %v593, %v604
    %v607 = vmul.f32 %v605, 1.442695
    %v608 = vpow.pop %v607
    %v609 = vmul.f32 %v606, 1.442695
    %v610 = vpow.pop %v609
    %v611 = vsel %vm598, %v608, 0.0
    %612 = vadd.xlane.f32.xlu0 %v611
    %v613 = vpop.xlane.xlu0 %612
    %v614 = vsel %vm598, %v610, 0.0
    %615 = vadd.xlane.f32.xlu0 %v614
    %v616 = vpop.xlane.xlu0 %615
    %v617 = vrcp.pop %v613
    %v618 = vrcp.pop %v616
    %v619 = vmul.f32 %v608, %v617
    %v620 = vmul.f32 %v610, %v618
    %v621 = vpack.c.bf16 %v619, %v619
    %v622 = vpack.c.bf16 %v620, %v620
    %v624 = vsel %vm598, %v621, 0
    %vm626 = vcmask 1043456
    %v628 = vsel %vm626, %v503, 0
    %630 = vmatprep.subr.bf16.mxu0 0
    %631 = vmatpush1.bf16.msra.mxu0 0
    %632 = vmatprep.subr.bf16.mxu0 0
    %633 = vmatpush1.bf16.msra.mxu0 0
    %634 = vmatprep.subr.bf16.mxu0 0
    %635 = vmatpush1.bf16.msra.mxu0 0
    %636 = vmatprep.subr.bf16.mxu0 0
    %637 = vmatpush1.bf16.msra.mxu0 0
    %638 = vmatprep.subr.bf16.mxu0 0
    %639 = vmatpush1.bf16.msra.mxu0 0
    %640 = vmatprep.subr.bf16.mxu0 0
    %641 = vmatpush1.bf16.msra.mxu0 0
    %642 = vmatprep.subr.bf16.mxu0 0
    %643 = vmatpush1.bf16.msra.mxu0 0
    %644 = vmatprep.subr.bf16.mxu0 0
    %645 = vmatpush1.bf16.msra.mxu0 %v628
    %646 = vmatprep.subr.bf16.mxu0 0
    %647 = vmatpush2.bf16.msra.mxu0 0
    %648 = vmatprep.subr.bf16.mxu0 0
    %649 = vmatpush2.bf16.msra.mxu0 0
    %650 = vmatprep.subr.bf16.mxu0 0
    %651 = vmatpush2.bf16.msra.mxu0 0
    %652 = vmatprep.subr.bf16.mxu0 0
    %653 = vmatpush2.bf16.msra.mxu0 0
    %654 = vmatprep.subr.bf16.mxu0 0
    %655 = vmatpush2.bf16.msra.mxu0 0
    %656 = vmatprep.subr.bf16.mxu0 0
    %657 = vmatpush2.bf16.msra.mxu0 0
    %658 = vmatprep.subr.bf16.mxu0 0
    %659 = vmatpush2.bf16.msra.mxu0 0
    %660 = vmatprep.subr.bf16.mxu0 0
    %661 = vmatpush2.bf16.msra.mxu0 0
    %662 = vmatprep.mubr.bf16.mxu0 0
    %663 = vmatmul.mubr.bf16.gmra.mxu0 %v624
    %v664 = vpop.f32.mrf.mxu0
    %v665 = vadd.f32 0.0, %v664
    %v666 = vpop.f32.mrf.mxu0
    %v667 = vpop.f32.mrf.mxu0
    %v668 = vpop.f32.mrf.mxu0
    %669 = vdwg.mxu0
    %v671 = vsel %vm598, %v622, 0
    %v674 = vsel %vm626, %v504, 0
    %676 = vmatprep.subr.bf16.mxu0 0
    %677 = vmatpush1.bf16.msra.mxu0 0
    %678 = vmatprep.subr.bf16.mxu0 0
    %679 = vmatpush1.bf16.msra.mxu0 0
    %680 = vmatprep.subr.bf16.mxu0 0
    %681 = vmatpush1.bf16.msra.mxu0 0
    %682 = vmatprep.subr.bf16.mxu0 0
    %683 = vmatpush1.bf16.msra.mxu0 0
    %684 = vmatprep.subr.bf16.mxu0 0
    %685 = vmatpush1.bf16.msra.mxu0 0
    %686 = vmatprep.subr.bf16.mxu0 0
    %687 = vmatpush1.bf16.msra.mxu0 0
    %688 = vmatprep.subr.bf16.mxu0 0
    %689 = vmatpush1.bf16.msra.mxu0 0
    %690 = vmatprep.subr.bf16.mxu0 0
    %691 = vmatpush1.bf16.msra.mxu0 %v674
    %692 = vmatprep.subr.bf16.mxu0 0
    %693 = vmatpush2.bf16.msra.mxu0 0
    %694 = vmatprep.subr.bf16.mxu0 0
    %695 = vmatpush2.bf16.msra.mxu0 0
    %696 = vmatprep.subr.bf16.mxu0 0
    %697 = vmatpush2.bf16.msra.mxu0 0
    %698 = vmatprep.subr.bf16.mxu0 0
    %699 = vmatpush2.bf16.msra.mxu0 0
    %700 = vmatprep.subr.bf16.mxu0 0
    %701 = vmatpush2.bf16.msra.mxu0 0
    %702 = vmatprep.subr.bf16.mxu0 0
    %703 = vmatpush2.bf16.msra.mxu0 0
    %704 = vmatprep.subr.bf16.mxu0 0
    %705 = vmatpush2.bf16.msra.mxu0 0
    %706 = vmatprep.subr.bf16.mxu0 0
    %707 = vmatpush2.bf16.msra.mxu0 0
    %708 = vmatprep.mubr.bf16.mxu0 0
    %709 = vmatmul.mubr.bf16.gmra.mxu0 %v671
    %v710 = vpop.f32.mrf.mxu0
    %v711 = vadd.f32 0.0, %v710
    %v712 = vpop.f32.mrf.mxu0
    %v713 = vpop.f32.mrf.mxu0
    %v714 = vpop.f32.mrf.mxu0
    %715 = vdwg.mxu0
    %717 = vrot.lane.b32.xlu0 %v499, 96
    %v718 = vpop.permute.xlu0 %717
    %720 = vrot.lane.b32.xlu0 %v501, 96
    %v721 = vpop.permute.xlu0 %720
    %v723 = vsel %vm505, %v718, 0
    %v726 = vsel %vm505, %v721, 0
    %728 = vmatprep.subr.bf16.mxu0 0
    %729 = vmatpush1.bf16.xpose.msra.mxu0 0
    %730 = vmatprep.subr.bf16.mxu0 0
    %731 = vmatpush1.bf16.xpose.msra.mxu0 0
    %732 = vmatprep.subr.bf16.mxu0 0
    %733 = vmatpush1.bf16.xpose.msra.mxu0 0
    %734 = vmatprep.subr.bf16.mxu0 0
    %735 = vmatpush1.bf16.xpose.msra.mxu0 0
    %736 = vmatprep.subr.bf16.mxu0 0
    %737 = vmatpush1.bf16.xpose.msra.mxu0 0
    %738 = vmatprep.subr.bf16.mxu0 0
    %739 = vmatpush1.bf16.xpose.msra.mxu0 0
    %740 = vmatprep.subr.bf16.mxu0 0
    %741 = vmatpush1.bf16.xpose.msra.mxu0 0
    %742 = vmatprep.subr.bf16.mxu0 0
    %743 = vmatpush1.bf16.xpose.msra.mxu0 %v726
    %744 = vmatprep.subr.bf16.mxu0 0
    %745 = vmatpush2.bf16.xpose.msra.mxu0 0
    %746 = vmatprep.subr.bf16.mxu0 0
    %747 = vmatpush2.bf16.xpose.msra.mxu0 0
    %748 = vmatprep.subr.bf16.mxu0 0
    %749 = vmatpush2.bf16.xpose.msra.mxu0 0
    %750 = vmatprep.subr.bf16.mxu0 0
    %751 = vmatpush2.bf16.xpose.msra.mxu0 0
    %752 = vmatprep.subr.bf16.mxu0 0
    %753 = vmatpush2.bf16.xpose.msra.mxu0 0
    %754 = vmatprep.subr.bf16.mxu0 0
    %755 = vmatpush2.bf16.xpose.msra.mxu0 0
    %756 = vmatprep.subr.bf16.mxu0 0
    %757 = vmatpush2.bf16.xpose.msra.mxu0 0
    %758 = vmatprep.subr.bf16.mxu0 0
    %759 = vmatpush2.bf16.xpose.msra.mxu0 0
    %760 = vmatprep.mubr.bf16.mxu0 0
    %761 = vmatmul.mubr.bf16.gmra.mxu0 %v723
    %v762 = vpop.f32.mrf.mxu0
    %v763 = vadd.f32 0.0, %v762
    %v764 = vpop.f32.mrf.mxu0
    %v765 = vpop.f32.mrf.mxu0
    %v766 = vpop.f32.mrf.mxu0
    %767 = vdwg.mxu0
    %769 = vrot.lane.b32.xlu0 %v500, 96
    %v770 = vpop.permute.xlu0 %769
    %772 = vrot.lane.b32.xlu0 %v502, 96
    %v773 = vpop.permute.xlu0 %772
    %v775 = vsel %vm505, %v770, 0
    %v778 = vsel %vm505, %v773, 0
    %780 = vmatprep.subr.bf16.mxu0 0
    %781 = vmatpush1.bf16.xpose.msra.mxu0 0
    %782 = vmatprep.subr.bf16.mxu0 0
    %783 = vmatpush1.bf16.xpose.msra.mxu0 0
    %784 = vmatprep.subr.bf16.mxu0 0
    %785 = vmatpush1.bf16.xpose.msra.mxu0 0
    %786 = vmatprep.subr.bf16.mxu0 0
    %787 = vmatpush1.bf16.xpose.msra.mxu0 0
    %788 = vmatprep.subr.bf16.mxu0 0
    %789 = vmatpush1.bf16.xpose.msra.mxu0 0
    %790 = vmatprep.subr.bf16.mxu0 0
    %791 = vmatpush1.bf16.xpose.msra.mxu0 0
    %792 = vmatprep.subr.bf16.mxu0 0
    %793 = vmatpush1.bf16.xpose.msra.mxu0 0
    %794 = vmatprep.subr.bf16.mxu0 0
    %795 = vmatpush1.bf16.xpose.msra.mxu0 %v778
    %796 = vmatprep.subr.bf16.mxu0 0
    %797 = vmatpush2.bf16.xpose.msra.mxu0 0
    %798 = vmatprep.subr.bf16.mxu0 0
    %799 = vmatpush2.bf16.xpose.msra.mxu0 0
    %800 = vmatprep.subr.bf16.mxu0 0
    %801 = vmatpush2.bf16.xpose.msra.mxu0 0
    %802 = vmatprep.subr.bf16.mxu0 0
    %803 = vmatpush2.bf16.xpose.msra.mxu0 0
    %804 = vmatprep.subr.bf16.mxu0 0
    %805 = vmatpush2.bf16.xpose.msra.mxu0 0
    %806 = vmatprep.subr.bf16.mxu0 0
    %807 = vmatpush2.bf16.xpose.msra.mxu0 0
    %808 = vmatprep.subr.bf16.mxu0 0
    %809 = vmatpush2.bf16.xpose.msra.mxu0 0
    %810 = vmatprep.subr.bf16.mxu0 0
    %811 = vmatpush2.bf16.xpose.msra.mxu0 0
    %812 = vmatprep.mubr.bf16.mxu0 0
    %813 = vmatmul.mubr.bf16.gmra.mxu0 %v775
    %v814 = vpop.f32.mrf.mxu0
    %v815 = vadd.f32 0.0, %v814
    %v816 = vpop.f32.mrf.mxu0
    %v817 = vpop.f32.mrf.mxu0
    %v818 = vpop.f32.mrf.mxu0
    %819 = vdwg.mxu0
    %v820 = vsel %vm598, %v763, -inf
    %821 = vmax.xlane.f32.xlu0 %v820
    %v822 = vpop.xlane.xlu0 %821
    %v823 = vsel %vm598, %v815, -inf
    %824 = vmax.xlane.f32.xlu0 %v823
    %v825 = vpop.xlane.xlu0 %824
    %v826 = vsub.f32 %v763, %v822
    %v827 = vsub.f32 %v815, %v825
    %v828 = vmul.f32 %v826, 1.442695
    %v829 = vpow.pop %v828
    %v830 = vmul.f32 %v827, 1.442695
    %v831 = vpow.pop %v830
    %v832 = vsel %vm598, %v829, 0.0
    %833 = vadd.xlane.f32.xlu0 %v832
    %v834 = vpop.xlane.xlu0 %833
    %v835 = vsel %vm598, %v831, 0.0
    %836 = vadd.xlane.f32.xlu0 %v835
    %v837 = vpop.xlane.xlu0 %836
    %v838 = vrcp.pop %v834
    %v839 = vrcp.pop %v837
    %v840 = vmul.f32 %v829, %v838
    %v841 = vmul.f32 %v831, %v839
    %v842 = vpack.c.bf16 %v840, %v840
    %v843 = vpack.c.bf16 %v841, %v841
    %845 = vrot.lane.b32.xlu0 %v503, 96
    %v846 = vpop.permute.xlu0 %845
    %v848 = vsel %vm598, %v842, 0
    %v851 = vsel %vm626, %v846, 0
    %853 = vmatprep.subr.bf16.mxu0 0
    %854 = vmatpush1.bf16.msra.mxu0 0
    %855 = vmatprep.subr.bf16.mxu0 0
    %856 = vmatpush1.bf16.msra.mxu0 0
    %857 = vmatprep.subr.bf16.mxu0 0
    %858 = vmatpush1.bf16.msra.mxu0 0
    %859 = vmatprep.subr.bf16.mxu0 0
    %860 = vmatpush1.bf16.msra.mxu0 0
    %861 = vmatprep.subr.bf16.mxu0 0
    %862 = vmatpush1.bf16.msra.mxu0 0
    %863 = vmatprep.subr.bf16.mxu0 0
    %864 = vmatpush1.bf16.msra.mxu0 0
    %865 = vmatprep.subr.bf16.mxu0 0
    %866 = vmatpush1.bf16.msra.mxu0 0
    %867 = vmatprep.subr.bf16.mxu0 0
    %868 = vmatpush1.bf16.msra.mxu0 %v851
    %869 = vmatprep.subr.bf16.mxu0 0
    %870 = vmatpush2.bf16.msra.mxu0 0
    %871 = vmatprep.subr.bf16.mxu0 0
    %872 = vmatpush2.bf16.msra.mxu0 0
    %873 = vmatprep.subr.bf16.mxu0 0
    %874 = vmatpush2.bf16.msra.mxu0 0
    %875 = vmatprep.subr.bf16.mxu0 0
    %876 = vmatpush2.bf16.msra.mxu0 0
    %877 = vmatprep.subr.bf16.mxu0 0
    %878 = vmatpush2.bf16.msra.mxu0 0
    %879 = vmatprep.subr.bf16.mxu0 0
    %880 = vmatpush2.bf16.msra.mxu0 0
    %881 = vmatprep.subr.bf16.mxu0 0
    %882 = vmatpush2.bf16.msra.mxu0 0
    %883 = vmatprep.subr.bf16.mxu0 0
    %884 = vmatpush2.bf16.msra.mxu0 0
    %885 = vmatprep.mubr.bf16.mxu0 0
    %886 = vmatmul.mubr.bf16.gmra.mxu0 %v848
    %v887 = vpop.f32.mrf.mxu0
    %v888 = vadd.f32 0.0, %v887
    %v889 = vpop.f32.mrf.mxu0
    %v890 = vpop.f32.mrf.mxu0
    %v891 = vpop.f32.mrf.mxu0
    %892 = vdwg.mxu0
    %894 = vrot.lane.b32.xlu0 %v504, 96
    %v895 = vpop.permute.xlu0 %894
    %v897 = vsel %vm598, %v843, 0
    %v900 = vsel %vm626, %v895, 0
    %902 = vmatprep.subr.bf16.mxu0 0
    %903 = vmatpush1.bf16.msra.mxu0 0
    %904 = vmatprep.subr.bf16.mxu0 0
    %905 = vmatpush1.bf16.msra.mxu0 0
    %906 = vmatprep.subr.bf16.mxu0 0
    %907 = vmatpush1.bf16.msra.mxu0 0
    %908 = vmatprep.subr.bf16.mxu0 0
    %909 = vmatpush1.bf16.msra.mxu0 0
    %910 = vmatprep.subr.bf16.mxu0 0
    %911 = vmatpush1.bf16.msra.mxu0 0
    %912 = vmatprep.subr.bf16.mxu0 0
    %913 = vmatpush1.bf16.msra.mxu0 0
    %914 = vmatprep.subr.bf16.mxu0 0
    %915 = vmatpush1.bf16.msra.mxu0 0
    %916 = vmatprep.subr.bf16.mxu0 0
    %917 = vmatpush1.bf16.msra.mxu0 %v900
    %918 = vmatprep.subr.bf16.mxu0 0
    %919 = vmatpush2.bf16.msra.mxu0 0
    %920 = vmatprep.subr.bf16.mxu0 0
    %921 = vmatpush2.bf16.msra.mxu0 0
    %922 = vmatprep.subr.bf16.mxu0 0
    %923 = vmatpush2.bf16.msra.mxu0 0
    %924 = vmatprep.subr.bf16.mxu0 0
    %925 = vmatpush2.bf16.msra.mxu0 0
    %926 = vmatprep.subr.bf16.mxu0 0
    %927 = vmatpush2.bf16.msra.mxu0 0
    %928 = vmatprep.subr.bf16.mxu0 0
    %929 = vmatpush2.bf16.msra.mxu0 0
    %930 = vmatprep.subr.bf16.mxu0 0
    %931 = vmatpush2.bf16.msra.mxu0 0
    %932 = vmatprep.subr.bf16.mxu0 0
    %933 = vmatpush2.bf16.msra.mxu0 0
    %934 = vmatprep.mubr.bf16.mxu0 0
    %935 = vmatmul.mubr.bf16.gmra.mxu0 %v897
    %v936 = vpop.f32.mrf.mxu0
    %v937 = vadd.f32 0.0, %v936
    %v938 = vpop.f32.mrf.mxu0
    %v939 = vpop.f32.mrf.mxu0
    %v940 = vpop.f32.mrf.mxu0
    %941 = vdwg.mxu0
    %942 = vrot.lane.b32.xlu0 %v499, 64
    %v943 = vpop.permute.xlu0 %942
    %944 = vrot.lane.b32.xlu0 %v501, 64
    %v945 = vpop.permute.xlu0 %944
    %v947 = vsel %vm505, %v943, 0
    %v950 = vsel %vm505, %v945, 0
    %952 = vmatprep.subr.bf16.mxu0 0
    %953 = vmatpush1.bf16.xpose.msra.mxu0 0
    %954 = vmatprep.subr.bf16.mxu0 0
    %955 = vmatpush1.bf16.xpose.msra.mxu0 0
    %956 = vmatprep.subr.bf16.mxu0 0
    %957 = vmatpush1.bf16.xpose.msra.mxu0 0
    %958 = vmatprep.subr.bf16.mxu0 0
    %959 = vmatpush1.bf16.xpose.msra.mxu0 0
    %960 = vmatprep.subr.bf16.mxu0 0
    %961 = vmatpush1.bf16.xpose.msra.mxu0 0
    %962 = vmatprep.subr.bf16.mxu0 0
    %963 = vmatpush1.bf16.xpose.msra.mxu0 0
    %964 = vmatprep.subr.bf16.mxu0 0
    %965 = vmatpush1.bf16.xpose.msra.mxu0 0
    %966 = vmatprep.subr.bf16.mxu0 0
    %967 = vmatpush1.bf16.xpose.msra.mxu0 %v950
    %968 = vmatprep.subr.bf16.mxu0 0
    %969 = vmatpush2.bf16.xpose.msra.mxu0 0
    %970 = vmatprep.subr.bf16.mxu0 0
    %971 = vmatpush2.bf16.xpose.msra.mxu0 0
    %972 = vmatprep.subr.bf16.mxu0 0
    %973 = vmatpush2.bf16.xpose.msra.mxu0 0
    %974 = vmatprep.subr.bf16.mxu0 0
    %975 = vmatpush2.bf16.xpose.msra.mxu0 0
    %976 = vmatprep.subr.bf16.mxu0 0
    %977 = vmatpush2.bf16.xpose.msra.mxu0 0
    %978 = vmatprep.subr.bf16.mxu0 0
    %979 = vmatpush2.bf16.xpose.msra.mxu0 0
    %980 = vmatprep.subr.bf16.mxu0 0
    %981 = vmatpush2.bf16.xpose.msra.mxu0 0
    %982 = vmatprep.subr.bf16.mxu0 0
    %983 = vmatpush2.bf16.xpose.msra.mxu0 0
    %984 = vmatprep.mubr.bf16.mxu0 0
    %985 = vmatmul.mubr.bf16.gmra.mxu0 %v947
    %v986 = vpop.f32.mrf.mxu0
    %v987 = vadd.f32 0.0, %v986
    %v988 = vpop.f32.mrf.mxu0
    %v989 = vpop.f32.mrf.mxu0
    %v990 = vpop.f32.mrf.mxu0
    %991 = vdwg.mxu0
    %992 = vrot.lane.b32.xlu0 %v500, 64
    %v993 = vpop.permute.xlu0 %992
    %994 = vrot.lane.b32.xlu0 %v502, 64
    %v995 = vpop.permute.xlu0 %994
    %v997 = vsel %vm505, %v993, 0
    %v1000 = vsel %vm505, %v995, 0
    %1002 = vmatprep.subr.bf16.mxu0 0
    %1003 = vmatpush1.bf16.xpose.msra.mxu0 0
    %1004 = vmatprep.subr.bf16.mxu0 0
    %1005 = vmatpush1.bf16.xpose.msra.mxu0 0
    %1006 = vmatprep.subr.bf16.mxu0 0
    %1007 = vmatpush1.bf16.xpose.msra.mxu0 0
    %1008 = vmatprep.subr.bf16.mxu0 0
    %1009 = vmatpush1.bf16.xpose.msra.mxu0 0
    %1010 = vmatprep.subr.bf16.mxu0 0
    %1011 = vmatpush1.bf16.xpose.msra.mxu0 0
    %1012 = vmatprep.subr.bf16.mxu0 0
    %1013 = vmatpush1.bf16.xpose.msra.mxu0 0
    %1014 = vmatprep.subr.bf16.mxu0 0
    %1015 = vmatpush1.bf16.xpose.msra.mxu0 0
    %1016 = vmatprep.subr.bf16.mxu0 0
    %1017 = vmatpush1.bf16.xpose.msra.mxu0 %v1000
    %1018 = vmatprep.subr.bf16.mxu0 0
    %1019 = vmatpush2.bf16.xpose.msra.mxu0 0
    %1020 = vmatprep.subr.bf16.mxu0 0
    %1021 = vmatpush2.bf16.xpose.msra.mxu0 0
    %1022 = vmatprep.subr.bf16.mxu0 0
    %1023 = vmatpush2.bf16.xpose.msra.mxu0 0
    %1024 = vmatprep.subr.bf16.mxu0 0
    %1025 = vmatpush2.bf16.xpose.msra.mxu0 0
    %1026 = vmatprep.subr.bf16.mxu0 0
    %1027 = vmatpush2.bf16.xpose.msra.mxu0 0
    %1028 = vmatprep.subr.bf16.mxu0 0
    %1029 = vmatpush2.bf16.xpose.msra.mxu0 0
    %1030 = vmatprep.subr.bf16.mxu0 0
    %1031 = vmatpush2.bf16.xpose.msra.mxu0 0
    %1032 = vmatprep.subr.bf16.mxu0 0
    %1033 = vmatpush2.bf16.xpose.msra.mxu0 0
    %1034 = vmatprep.mubr.bf16.mxu0 0
    %1035 = vmatmul.mubr.bf16.gmra.mxu0 %v997
    %v1036 = vpop.f32.mrf.mxu0
    %v1037 = vadd.f32 0.0, %v1036
    %v1038 = vpop.f32.mrf.mxu0
    %v1039 = vpop.f32.mrf.mxu0
    %v1040 = vpop.f32.mrf.mxu0
    %1041 = vdwg.mxu0
    %v1042 = vsel %vm598, %v987, -inf
    %1043 = vmax.xlane.f32.xlu0 %v1042
    %v1044 = vpop.xlane.xlu0 %1043
    %v1045 = vsel %vm598, %v1037, -inf
    %1046 = vmax.xlane.f32.xlu0 %v1045
    %v1047 = vpop.xlane.xlu0 %1046
    %v1048 = vsub.f32 %v987, %v1044
    %v1049 = vsub.f32 %v1037, %v1047
    %v1050 = vmul.f32 %v1048, 1.442695
    %v1051 = vpow.pop %v1050
    %v1052 = vmul.f32 %v1049, 1.442695
    %v1053 = vpow.pop %v1052
    %v1054 = vsel %vm598, %v1051, 0.0
    %1055 = vadd.xlane.f32.xlu0 %v1054
    %v1056 = vpop.xlane.xlu0 %1055
    %v1057 = vsel %vm598, %v1053, 0.0
    %1058 = vadd.xlane.f32.xlu0 %v1057
    %v1059 = vpop.xlane.xlu0 %1058
    %v1060 = vrcp.pop %v1056
    %v1061 = vrcp.pop %v1059
    %v1062 = vmul.f32 %v1051, %v1060
    %v1063 = vmul.f32 %v1053, %v1061
    %v1064 = vpack.c.bf16 %v1062, %v1062
    %v1065 = vpack.c.bf16 %v1063, %v1063
    %1066 = vrot.lane.b32.xlu0 %v503, 64
    %v1067 = vpop.permute.xlu0 %1066
    %v1069 = vsel %vm598, %v1064, 0
    %v1072 = vsel %vm626, %v1067, 0
    %1074 = vmatprep.subr.bf16.mxu0 0
    %1075 = vmatpush1.bf16.msra.mxu0 0
    %1076 = vmatprep.subr.bf16.mxu0 0
    %1077 = vmatpush1.bf16.msra.mxu0 0
    %1078 = vmatprep.subr.bf16.mxu0 0
    %1079 = vmatpush1.bf16.msra.mxu0 0
    %1080 = vmatprep.subr.bf16.mxu0 0
    %1081 = vmatpush1.bf16.msra.mxu0 0
    %1082 = vmatprep.subr.bf16.mxu0 0
    %1083 = vmatpush1.bf16.msra.mxu0 0
    %1084 = vmatprep.subr.bf16.mxu0 0
    %1085 = vmatpush1.bf16.msra.mxu0 0
    %1086 = vmatprep.subr.bf16.mxu0 0
    %1087 = vmatpush1.bf16.msra.mxu0 0
    %1088 = vmatprep.subr.bf16.mxu0 0
    %1089 = vmatpush1.bf16.msra.mxu0 %v1072
    %1090 = vmatprep.subr.bf16.mxu0 0
    %1091 = vmatpush2.bf16.msra.mxu0 0
    %1092 = vmatprep.subr.bf16.mxu0 0
    %1093 = vmatpush2.bf16.msra.mxu0 0
    %1094 = vmatprep.subr.bf16.mxu0 0
    %1095 = vmatpush2.bf16.msra.mxu0 0
    %1096 = vmatprep.subr.bf16.mxu0 0
    %1097 = vmatpush2.bf16.msra.mxu0 0
    %1098 = vmatprep.subr.bf16.mxu0 0
    %1099 = vmatpush2.bf16.msra.mxu0 0
    %1100 = vmatprep.subr.bf16.mxu0 0
    %1101 = vmatpush2.bf16.msra.mxu0 0
    %1102 = vmatprep.subr.bf16.mxu0 0
    %1103 = vmatpush2.bf16.msra.mxu0 0
    %1104 = vmatprep.subr.bf16.mxu0 0
    %1105 = vmatpush2.bf16.msra.mxu0 0
    %1106 = vmatprep.mubr.bf16.mxu0 0
    %1107 = vmatmul.mubr.bf16.gmra.mxu0 %v1069
    %v1108 = vpop.f32.mrf.mxu0
    %v1109 = vadd.f32 0.0, %v1108
    %v1110 = vpop.f32.mrf.mxu0
    %v1111 = vpop.f32.mrf.mxu0
    %v1112 = vpop.f32.mrf.mxu0
    %1113 = vdwg.mxu0
    %1114 = vrot.lane.b32.xlu0 %v504, 64
    %v1115 = vpop.permute.xlu0 %1114
    %v1117 = vsel %vm598, %v1065, 0
    %v1120 = vsel %vm626, %v1115, 0
    %1122 = vmatprep.subr.bf16.mxu0 0
    %1123 = vmatpush1.bf16.msra.mxu0 0
    %1124 = vmatprep.subr.bf16.mxu0 0
    %1125 = vmatpush1.bf16.msra.mxu0 0
    %1126 = vmatprep.subr.bf16.mxu0 0
    %1127 = vmatpush1.bf16.msra.mxu0 0
    %1128 = vmatprep.subr.bf16.mxu0 0
    %1129 = vmatpush1.bf16.msra.mxu0 0
    %1130 = vmatprep.subr.bf16.mxu0 0
    %1131 = vmatpush1.bf16.msra.mxu0 0
    %1132 = vmatprep.subr.bf16.mxu0 0
    %1133 = vmatpush1.bf16.msra.mxu0 0
    %1134 = vmatprep.subr.bf16.mxu0 0
    %1135 = vmatpush1.bf16.msra.mxu0 0
    %1136 = vmatprep.subr.bf16.mxu0 0
    %1137 = vmatpush1.bf16.msra.mxu0 %v1120
    %1138 = vmatprep.subr.bf16.mxu0 0
    %1139 = vmatpush2.bf16.msra.mxu0 0
    %1140 = vmatprep.subr.bf16.mxu0 0
    %1141 = vmatpush2.bf16.msra.mxu0 0
    %1142 = vmatprep.subr.bf16.mxu0 0
    %1143 = vmatpush2.bf16.msra.mxu0 0
    %1144 = vmatprep.subr.bf16.mxu0 0
    %1145 = vmatpush2.bf16.msra.mxu0 0
    %1146 = vmatprep.subr.bf16.mxu0 0
    %1147 = vmatpush2.bf16.msra.mxu0 0
    %1148 = vmatprep.subr.bf16.mxu0 0
    %1149 = vmatpush2.bf16.msra.mxu0 0
    %1150 = vmatprep.subr.bf16.mxu0 0
    %1151 = vmatpush2.bf16.msra.mxu0 0
    %1152 = vmatprep.subr.bf16.mxu0 0
    %1153 = vmatpush2.bf16.msra.mxu0 0
    %1154 = vmatprep.mubr.bf16.mxu0 0
    %1155 = vmatmul.mubr.bf16.gmra.mxu0 %v1117
    %v1156 = vpop.f32.mrf.mxu0
    %v1157 = vadd.f32 0.0, %v1156
    %v1158 = vpop.f32.mrf.mxu0
    %v1159 = vpop.f32.mrf.mxu0
    %v1160 = vpop.f32.mrf.mxu0
    %1161 = vdwg.mxu0
    %1162 = vrot.lane.b32.xlu0 %v499, 32
    %v1163 = vpop.permute.xlu0 %1162
    %1164 = vrot.lane.b32.xlu0 %v501, 32
    %v1165 = vpop.permute.xlu0 %1164
    %v1167 = vsel %vm505, %v1163, 0
    %v1170 = vsel %vm505, %v1165, 0
    %1172 = vmatprep.subr.bf16.mxu0 0
    %1173 = vmatpush1.bf16.xpose.msra.mxu0 0
    %1174 = vmatprep.subr.bf16.mxu0 0
    %1175 = vmatpush1.bf16.xpose.msra.mxu0 0
    %1176 = vmatprep.subr.bf16.mxu0 0
    %1177 = vmatpush1.bf16.xpose.msra.mxu0 0
    %1178 = vmatprep.subr.bf16.mxu0 0
    %1179 = vmatpush1.bf16.xpose.msra.mxu0 0
    %1180 = vmatprep.subr.bf16.mxu0 0
    %1181 = vmatpush1.bf16.xpose.msra.mxu0 0
    %1182 = vmatprep.subr.bf16.mxu0 0
    %1183 = vmatpush1.bf16.xpose.msra.mxu0 0
    %1184 = vmatprep.subr.bf16.mxu0 0
    %1185 = vmatpush1.bf16.xpose.msra.mxu0 0
    %1186 = vmatprep.subr.bf16.mxu0 0
    %1187 = vmatpush1.bf16.xpose.msra.mxu0 %v1170
    %1188 = vmatprep.subr.bf16.mxu0 0
    %1189 = vmatpush2.bf16.xpose.msra.mxu0 0
    %1190 = vmatprep.subr.bf16.mxu0 0
    %1191 = vmatpush2.bf16.xpose.msra.mxu0 0
    %1192 = vmatprep.subr.bf16.mxu0 0
    %1193 = vmatpush2.bf16.xpose.msra.mxu0 0
    %1194 = vmatprep.subr.bf16.mxu0 0
    %1195 = vmatpush2.bf16.xpose.msra.mxu0 0
    %1196 = vmatprep.subr.bf16.mxu0 0
    %1197 = vmatpush2.bf16.xpose.msra.mxu0 0
    %1198 = vmatprep.subr.bf16.mxu0 0
    %1199 = vmatpush2.bf16.xpose.msra.mxu0 0
    %1200 = vmatprep.subr.bf16.mxu0 0
    %1201 = vmatpush2.bf16.xpose.msra.mxu0 0
    %1202 = vmatprep.subr.bf16.mxu0 0
    %1203 = vmatpush2.bf16.xpose.msra.mxu0 0
    %1204 = vmatprep.mubr.bf16.mxu0 0
    %1205 = vmatmul.mubr.bf16.gmra.mxu0 %v1167
    %v1206 = vpop.f32.mrf.mxu0
    %v1207 = vadd.f32 0.0, %v1206
    %v1208 = vpop.f32.mrf.mxu0
    %v1209 = vpop.f32.mrf.mxu0
    %v1210 = vpop.f32.mrf.mxu0
    %1211 = vdwg.mxu0
    %1212 = vrot.lane.b32.xlu0 %v500, 32
    %v1213 = vpop.permute.xlu0 %1212
    %1214 = vrot.lane.b32.xlu0 %v502, 32
    %v1215 = vpop.permute.xlu0 %1214
    %v1217 = vsel %vm505, %v1213, 0
    %v1220 = vsel %vm505, %v1215, 0
    %1222 = vmatprep.subr.bf16.mxu0 0
    %1223 = vmatpush1.bf16.xpose.msra.mxu0 0
    %1224 = vmatprep.subr.bf16.mxu0 0
    %1225 = vmatpush1.bf16.xpose.msra.mxu0 0
    %1226 = vmatprep.subr.bf16.mxu0 0
    %1227 = vmatpush1.bf16.xpose.msra.mxu0 0
    %1228 = vmatprep.subr.bf16.mxu0 0
    %1229 = vmatpush1.bf16.xpose.msra.mxu0 0
    %1230 = vmatprep.subr.bf16.mxu0 0
    %1231 = vmatpush1.bf16.xpose.msra.mxu0 0
    %1232 = vmatprep.subr.bf16.mxu0 0
    %1233 = vmatpush1.bf16.xpose.msra.mxu0 0
    %1234 = vmatprep.subr.bf16.mxu0 0
    %1235 = vmatpush1.bf16.xpose.msra.mxu0 0
    %1236 = vmatprep.subr.bf16.mxu0 0
    %1237 = vmatpush1.bf16.xpose.msra.mxu0 %v1220
    %1238 = vmatprep.subr.bf16.mxu0 0
    %1239 = vmatpush2.bf16.xpose.msra.mxu0 0
    %1240 = vmatprep.subr.bf16.mxu0 0
    %1241 = vmatpush2.bf16.xpose.msra.mxu0 0
    %1242 = vmatprep.subr.bf16.mxu0 0
    %1243 = vmatpush2.bf16.xpose.msra.mxu0 0
    %1244 = vmatprep.subr.bf16.mxu0 0
    %1245 = vmatpush2.bf16.xpose.msra.mxu0 0
    %1246 = vmatprep.subr.bf16.mxu0 0
    %1247 = vmatpush2.bf16.xpose.msra.mxu0 0
    %1248 = vmatprep.subr.bf16.mxu0 0
    %1249 = vmatpush2.bf16.xpose.msra.mxu0 0
    %1250 = vmatprep.subr.bf16.mxu0 0
    %1251 = vmatpush2.bf16.xpose.msra.mxu0 0
    %1252 = vmatprep.subr.bf16.mxu0 0
    %1253 = vmatpush2.bf16.xpose.msra.mxu0 0
    %1254 = vmatprep.mubr.bf16.mxu0 0
    %1255 = vmatmul.mubr.bf16.gmra.mxu0 %v1217
    %v1256 = vpop.f32.mrf.mxu0
    %v1257 = vadd.f32 0.0, %v1256
    %v1258 = vpop.f32.mrf.mxu0
    %v1259 = vpop.f32.mrf.mxu0
    %v1260 = vpop.f32.mrf.mxu0
    %1261 = vdwg.mxu0
    %v1262 = vsel %vm598, %v1207, -inf
    %1263 = vmax.xlane.f32.xlu0 %v1262
    %v1264 = vpop.xlane.xlu0 %1263
    %v1265 = vsel %vm598, %v1257, -inf
    %1266 = vmax.xlane.f32.xlu0 %v1265
    %v1267 = vpop.xlane.xlu0 %1266
    %v1268 = vsub.f32 %v1207, %v1264
    %v1269 = vsub.f32 %v1257, %v1267
    %v1270 = vmul.f32 %v1268, 1.442695
    %v1271 = vpow.pop %v1270
    %v1272 = vmul.f32 %v1269, 1.442695
    %v1273 = vpow.pop %v1272
    %v1274 = vsel %vm598, %v1271, 0.0
    %1275 = vadd.xlane.f32.xlu0 %v1274
    %v1276 = vpop.xlane.xlu0 %1275
    %v1277 = vsel %vm598, %v1273, 0.0
    %1278 = vadd.xlane.f32.xlu0 %v1277
    %v1279 = vpop.xlane.xlu0 %1278
    %v1280 = vrcp.pop %v1276
    %v1281 = vrcp.pop %v1279
    %v1282 = vmul.f32 %v1271, %v1280
    %v1283 = vmul.f32 %v1273, %v1281
    %v1284 = vpack.c.bf16 %v1282, %v1282
    %v1285 = vpack.c.bf16 %v1283, %v1283
    %1286 = vrot.lane.b32.xlu0 %v503, 32
    %v1287 = vpop.permute.xlu0 %1286
    %v1289 = vsel %vm598, %v1284, 0
    %v1292 = vsel %vm626, %v1287, 0
    %1294 = vmatprep.subr.bf16.mxu0 0
    %1295 = vmatpush1.bf16.msra.mxu0 0
    %1296 = vmatprep.subr.bf16.mxu0 0
    %1297 = vmatpush1.bf16.msra.mxu0 0
    %1298 = vmatprep.subr.bf16.mxu0 0
    %1299 = vmatpush1.bf16.msra.mxu0 0
    %1300 = vmatprep.subr.bf16.mxu0 0
    %1301 = vmatpush1.bf16.msra.mxu0 0
    %1302 = vmatprep.subr.bf16.mxu0 0
    %1303 = vmatpush1.bf16.msra.mxu0 0
    %1304 = vmatprep.subr.bf16.mxu0 0
    %1305 = vmatpush1.bf16.msra.mxu0 0
    %1306 = vmatprep.subr.bf16.mxu0 0
    %1307 = vmatpush1.bf16.msra.mxu0 0
    %1308 = vmatprep.subr.bf16.mxu0 0
    %1309 = vmatpush1.bf16.msra.mxu0 %v1292
    %1310 = vmatprep.subr.bf16.mxu0 0
    %1311 = vmatpush2.bf16.msra.mxu0 0
    %1312 = vmatprep.subr.bf16.mxu0 0
    %1313 = vmatpush2.bf16.msra.mxu0 0
    %1314 = vmatprep.subr.bf16.mxu0 0
    %1315 = vmatpush2.bf16.msra.mxu0 0
    %1316 = vmatprep.subr.bf16.mxu0 0
    %1317 = vmatpush2.bf16.msra.mxu0 0
    %1318 = vmatprep.subr.bf16.mxu0 0
    %1319 = vmatpush2.bf16.msra.mxu0 0
    %1320 = vmatprep.subr.bf16.mxu0 0
    %1321 = vmatpush2.bf16.msra.mxu0 0
    %1322 = vmatprep.subr.bf16.mxu0 0
    %1323 = vmatpush2.bf16.msra.mxu0 0
    %1324 = vmatprep.subr.bf16.mxu0 0
    %1325 = vmatpush2.bf16.msra.mxu0 0
    %1326 = vmatprep.mubr.bf16.mxu0 0
    %1327 = vmatmul.mubr.bf16.gmra.mxu0 %v1289
    %v1328 = vpop.f32.mrf.mxu0
    %v1329 = vadd.f32 0.0, %v1328
    %v1330 = vpop.f32.mrf.mxu0
    %v1331 = vpop.f32.mrf.mxu0
    %v1332 = vpop.f32.mrf.mxu0
    %1333 = vdwg.mxu0
    %1334 = vrot.lane.b32.xlu0 %v504, 32
    %v1335 = vpop.permute.xlu0 %1334
    %v1337 = vsel %vm598, %v1285, 0
    %v1340 = vsel %vm626, %v1335, 0
    %1342 = vmatprep.subr.bf16.mxu0 0
    %1343 = vmatpush1.bf16.msra.mxu0 0
    %1344 = vmatprep.subr.bf16.mxu0 0
    %1345 = vmatpush1.bf16.msra.mxu0 0
    %1346 = vmatprep.subr.bf16.mxu0 0
    %1347 = vmatpush1.bf16.msra.mxu0 0
    %1348 = vmatprep.subr.bf16.mxu0 0
    %1349 = vmatpush1.bf16.msra.mxu0 0
    %1350 = vmatprep.subr.bf16.mxu0 0
    %1351 = vmatpush1.bf16.msra.mxu0 0
    %1352 = vmatprep.subr.bf16.mxu0 0
    %1353 = vmatpush1.bf16.msra.mxu0 0
    %1354 = vmatprep.subr.bf16.mxu0 0
    %1355 = vmatpush1.bf16.msra.mxu0 0
    %1356 = vmatprep.subr.bf16.mxu0 0
    %1357 = vmatpush1.bf16.msra.mxu0 %v1340
    %1358 = vmatprep.subr.bf16.mxu0 0
    %1359 = vmatpush2.bf16.msra.mxu0 0
    %1360 = vmatprep.subr.bf16.mxu0 0
    %1361 = vmatpush2.bf16.msra.mxu0 0
    %1362 = vmatprep.subr.bf16.mxu0 0
    %1363 = vmatpush2.bf16.msra.mxu0 0
    %1364 = vmatprep.subr.bf16.mxu0 0
    %1365 = vmatpush2.bf16.msra.mxu0 0
    %1366 = vmatprep.subr.bf16.mxu0 0
    %1367 = vmatpush2.bf16.msra.mxu0 0
    %1368 = vmatprep.subr.bf16.mxu0 0
    %1369 = vmatpush2.bf16.msra.mxu0 0
    %1370 = vmatprep.subr.bf16.mxu0 0
    %1371 = vmatpush2.bf16.msra.mxu0 0
    %1372 = vmatprep.subr.bf16.mxu0 0
    %1373 = vmatpush2.bf16.msra.mxu0 0
    %1374 = vmatprep.mubr.bf16.mxu0 0
    %1375 = vmatmul.mubr.bf16.gmra.mxu0 %v1337
    %v1376 = vpop.f32.mrf.mxu0
    %v1377 = vadd.f32 0.0, %v1376
    %v1378 = vpop.f32.mrf.mxu0
    %v1379 = vpop.f32.mrf.mxu0
    %v1380 = vpop.f32.mrf.mxu0
    %1381 = vdwg.mxu0
    %1384 = vrot.lane.b32.xlu0 %v888, 32
    %v1385 = vpop.permute.xlu0 %1384
    %1386 = vrot.lane.b32.xlu0 %v937, 32
    %v1387 = vpop.permute.xlu0 %1386
    %1392 = vrot.lane.b32.xlu0 %v1109, 64
    %v1393 = vpop.permute.xlu0 %1392
    %1394 = vrot.lane.b32.xlu0 %v1157, 64
    %v1395 = vpop.permute.xlu0 %1394
    %1400 = vrot.lane.b32.xlu0 %v1329, 96
    %v1401 = vpop.permute.xlu0 %1400
    %1402 = vrot.lane.b32.xlu0 %v1377, 96
    %v1403 = vpop.permute.xlu0 %1402
    %v1406 = vsel %vm505, %v665, %v1385
    %v1407 = vsel %vm505, %v711, %v1387
    %vm1408 = vcmask 523264
    %v1409 = vsel %vm1408, %v1406, %v1393
    %v1410 = vsel %vm1408, %v1407, %v1395
    %vm1411 = vcmask 785408
    %v1412 = vsel %vm1411, %v1409, %v1401
    %v1413 = vsel %vm1411, %v1410, %v1403
    %v1414 = vpack.c.bf16 %v1413, %v1412
    %v1415 = vld [vmem:[#allocation10] sm:$0xf]
    %v1416 = vld [vmem:[#allocation10 + $0x4] sm:$0xf]
    %v1417 = vld [vmem:[#allocation10 + $0x8] sm:$0xf]
    %v1418 = vld [vmem:[#allocation10 + $0xc] sm:$0xf]
    %v1419 = vld [vmem:[#allocation10 + $0x10] sm:$0xf]
    %v1420 = vld [vmem:[#allocation10 + $0x14] sm:$0xf]
    %v1421 = vld [vmem:[#allocation10 + $0x18] sm:$0xf]
    %v1422 = vld [vmem:[#allocation10 + $0x1c] sm:$0xf]
    %v1423 = vld [vmem:[#allocation10 + $0x20] sm:$0xf]
    %v1424 = vld [vmem:[#allocation10 + $0x24] sm:$0xf]
    %v1425 = vld [vmem:[#allocation10 + $0x28] sm:$0xf]
    %v1426 = vld [vmem:[#allocation10 + $0x2c] sm:$0xf]
    %v1427 = vld [vmem:[#allocation10 + $0x30] sm:$0xf]
    %v1428 = vld [vmem:[#allocation10 + $0x34] sm:$0xf]
    %v1429 = vld [vmem:[#allocation10 + $0x38] sm:$0xf]
    %v1430 = vld [vmem:[#allocation10 + $0x3c] sm:$0xf]
    %v1431 = vld [vmem:[#allocation14 + $0x3] sm:$0x1]
    %v1432 = vlaneseq
    %v1433 = vshrl.u32 %v1432, 7
    %v1434 = vsub.s32 0, %v1433
    %v1435 = vrot.slane %v1431, %v1434
    %v1452 = vunpack.c.l.b16 %v1415
    %v1453 = vunpack.c.l.b16 %v1416
    %v1454 = vunpack.c.l.b16 %v1417
    %v1455 = vunpack.c.l.b16 %v1418
    %v1456 = vunpack.c.l.b16 %v1419
    %v1457 = vunpack.c.l.b16 %v1420
    %v1458 = vunpack.c.l.b16 %v1421
    %v1459 = vunpack.c.l.b16 %v1422
    %v1460 = vunpack.c.l.b16 %v1423
    %v1461 = vunpack.c.l.b16 %v1424
    %v1462 = vunpack.c.l.b16 %v1425
    %v1463 = vunpack.c.l.b16 %v1426
    %v1464 = vunpack.c.l.b16 %v1427
    %v1465 = vunpack.c.l.b16 %v1428
    %v1466 = vunpack.c.l.b16 %v1429
    %v1467 = vunpack.c.l.b16 %v1430
    %v1468 = vpack.c.b16 %v1453, %v1452
    %v1469 = vpack.c.b16 %v1455, %v1454
    %v1470 = vpack.c.b16 %v1457, %v1456
    %v1471 = vpack.c.b16 %v1459, %v1458
    %v1472 = vpack.c.b16 %v1461, %v1460
    %v1473 = vpack.c.b16 %v1463, %v1462
    %v1474 = vpack.c.b16 %v1465, %v1464
    %v1475 = vpack.c.b16 %v1467, %v1466
    %1484 = vmatprep.subr.bf16.mxu0 0
    %1485 = vmatpush1.bf16.msra.mxu0 %v1475
    %1486 = vmatprep.subr.bf16.mxu0 0
    %1487 = vmatpush1.bf16.msra.mxu0 %v1474
    %1488 = vmatprep.subr.bf16.mxu0 0
    %1489 = vmatpush1.bf16.msra.mxu0 %v1473
    %1490 = vmatprep.subr.bf16.mxu0 0
    %1491 = vmatpush1.bf16.msra.mxu0 %v1472
    %1492 = vmatprep.subr.bf16.mxu0 0
    %1493 = vmatpush1.bf16.msra.mxu0 %v1471
    %1494 = vmatprep.subr.bf16.mxu0 0
    %1495 = vmatpush1.bf16.msra.mxu0 %v1470
    %1496 = vmatprep.subr.bf16.mxu0 0
    %1497 = vmatpush1.bf16.msra.mxu0 %v1469
    %1498 = vmatprep.subr.bf16.mxu0 0
    %1499 = vmatpush1.bf16.msra.mxu0 %v1468
    %1500 = vmatprep.subr.bf16.mxu0 0
    %1501 = vmatpush2.bf16.msra.mxu0 0
    %1502 = vmatprep.subr.bf16.mxu0 0
    %1503 = vmatpush2.bf16.msra.mxu0 0
    %1504 = vmatprep.subr.bf16.mxu0 0
    %1505 = vmatpush2.bf16.msra.mxu0 0
    %1506 = vmatprep.subr.bf16.mxu0 0
    %1507 = vmatpush2.bf16.msra.mxu0 0
    %1508 = vmatprep.subr.bf16.mxu0 0
    %1509 = vmatpush2.bf16.msra.mxu0 0
    %1510 = vmatprep.subr.bf16.mxu0 0
    %1511 = vmatpush2.bf16.msra.mxu0 0
    %1512 = vmatprep.subr.bf16.mxu0 0
    %1513 = vmatpush2.bf16.msra.mxu0 0
    %1514 = vmatprep.subr.bf16.mxu0 0
    %1515 = vmatpush2.bf16.msra.mxu0 0
    %1516 = vmatprep.mubr.bf16.mxu0 0
    %1517 = vmatmul.mubr.bf16.gmra.mxu0 %v1414
    %v1518 = vpop.f32.mrf.mxu0
    %v1519 = vadd.f32 %v1435, %v1518
    %v1520 = vpop.f32.mrf.mxu0
    %v1521 = vpop.f32.mrf.mxu0
    %v1522 = vadd.f32 %v1435, %v1521
    %v1523 = vpop.f32.mrf.mxu0
    %1524 = vdwg.mxu0
    %v1525 = vadd.f32 %v497, %v1519
    %v1526 = vadd.f32 %v498, %v1522
    %v1527 = vld [vmem:[#allocation14 + $0x5] sm:$0x1]
    %v1528 = vld [vmem:[#allocation14 + $0x6] sm:$0x1]
    %1529 = vadd.xlane.f32.xlu0 %v1525
    %v1530 = vpop.xlane.xlu0 %1529
    %1531 = vadd.xlane.f32.xlu0 %v1526
    %v1532 = vpop.xlane.xlu0 %1531
    %v1533 = vrcp.pop 128.0
    %v1534 = vmul.f32 %v1530, %v1533
    %v1535 = vmul.f32 %v1532, %v1533
    %v1536 = vsub.f32 %v1525, %v1534
    %v1537 = vsub.f32 %v1526, %v1535
    %v1538 = vmul.f32 %v1536, %v1536
    %v1539 = vmul.f32 %v1537, %v1537
    %1540 = vadd.xlane.f32.xlu0 %v1538
    %v1541 = vpop.xlane.xlu0 %1540
    %1542 = vadd.xlane.f32.xlu0 %v1539
    %v1543 = vpop.xlane.xlu0 %1542
    %v1544 = vmul.f32 %v1541, %v1533
    %v1545 = vmul.f32 %v1543, %v1533
    %v1546 = vadd.f32 %v1544, 1e-06
    %v1547 = vadd.f32 %v1545, 1e-06
    %v1548 = vrsqrt.pop %v1546
    %v1549 = vrsqrt.pop %v1547
    %v1550 = vmul.f32 %v1536, %v1548
    %v1551 = vmul.f32 %v1537, %v1549
    %v1552 = vlaneseq
    %v1553 = vshrl.u32 %v1552, 7
    %v1554 = vsub.s32 0, %v1553
    %v1555 = vrot.slane %v1527, %v1554
    %v1556 = vmul.f32 %v1550, %v1555
    %v1557 = vmul.f32 %v1551, %v1555
    %v1558 = vlaneseq
    %v1559 = vshrl.u32 %v1558, 7
    %v1560 = vsub.s32 0, %v1559
    %v1561 = vrot.slane %v1528, %v1560
    %v1562 = vadd.f32 %v1556, %v1561
    %v1563 = vadd.f32 %v1557, %v1561
    %v1564 = vpack.c.bf16 %v1563, %v1562
    %v1565 = vld [vmem:[#allocation11] sm:$0xff]
    %v1566 = vld [vmem:[#allocation11 + $0x8] sm:$0xff]
    %v1567 = vld [vmem:[#allocation11 + $0x10] sm:$0xff]
    %v1568 = vld [vmem:[#allocation11 + $0x18] sm:$0xff]
    %v1569 = vld [vmem:[#allocation11 + $0x20] sm:$0xff]
    %v1570 = vld [vmem:[#allocation11 + $0x28] sm:$0xff]
    %v1571 = vld [vmem:[#allocation11 + $0x30] sm:$0xff]
    %v1572 = vld [vmem:[#allocation11 + $0x38] sm:$0xff]
    %v1573 = vld [vmem:[#allocation11 + $0x40] sm:$0xff]
    %v1574 = vld [vmem:[#allocation11 + $0x48] sm:$0xff]
    %v1575 = vld [vmem:[#allocation11 + $0x50] sm:$0xff]
    %v1576 = vld [vmem:[#allocation11 + $0x58] sm:$0xff]
    %v1577 = vld [vmem:[#allocation11 + $0x60] sm:$0xff]
    %v1578 = vld [vmem:[#allocation11 + $0x68] sm:$0xff]
    %v1579 = vld [vmem:[#allocation11 + $0x70] sm:$0xff]
    %v1580 = vld [vmem:[#allocation11 + $0x78] sm:$0xff]
    %v1581 = vld [vmem:[%s8] sm:$0x3]
    %v1583 = vlaneseq
    %v1584 = vshrl.u32 %v1583, 7
    %v1585 = vsub.s32 0, %v1584
    %v1586 = vrot.slane %v1581, %v1585
    %v1587 = vlaneseq
    %v1588 = vshrl.u32 %v1587, 7
    %v1589 = vsub.s32 1, %v1588
    %v1590 = vrot.slane %v1581, %v1589
    %v1609 = vunpack.c.l.b16 %v1565
    %v1610 = vunpack.c.h.b16 %v1565
    %v1611 = vunpack.c.l.b16 %v1566
    %v1612 = vunpack.c.h.b16 %v1566
    %v1613 = vunpack.c.l.b16 %v1567
    %v1614 = vunpack.c.h.b16 %v1567
    %v1615 = vunpack.c.l.b16 %v1568
    %v1616 = vunpack.c.h.b16 %v1568
    %v1617 = vunpack.c.l.b16 %v1569
    %v1618 = vunpack.c.h.b16 %v1569
    %v1619 = vunpack.c.l.b16 %v1570
    %v1620 = vunpack.c.h.b16 %v1570
    %v1621 = vunpack.c.l.b16 %v1571
    %v1622 = vunpack.c.h.b16 %v1571
    %v1623 = vunpack.c.l.b16 %v1572
    %v1624 = vunpack.c.h.b16 %v1572
    %v1625 = vunpack.c.l.b16 %v1573
    %v1626 = vunpack.c.h.b16 %v1573
    %v1627 = vunpack.c.l.b16 %v1574
    %v1628 = vunpack.c.h.b16 %v1574
    %v1629 = vunpack.c.l.b16 %v1575
    %v1630 = vunpack.c.h.b16 %v1575
    %v1631 = vunpack.c.l.b16 %v1576
    %v1632 = vunpack.c.h.b16 %v1576
    %v1633 = vunpack.c.l.b16 %v1577
    %v1634 = vunpack.c.h.b16 %v1577
    %v1635 = vunpack.c.l.b16 %v1578
    %v1636 = vunpack.c.h.b16 %v1578
    %v1637 = vunpack.c.l.b16 %v1579
    %v1638 = vunpack.c.h.b16 %v1579
    %v1639 = vunpack.c.l.b16 %v1580
    %v1640 = vunpack.c.h.b16 %v1580
    %v1641 = vpack.c.b16 %v1611, %v1609
    %v1642 = vpack.c.b16 %v1612, %v1610
    %v1643 = vpack.c.b16 %v1615, %v1613
    %v1644 = vpack.c.b16 %v1616, %v1614
    %v1645 = vpack.c.b16 %v1619, %v1617
    %v1646 = vpack.c.b16 %v1620, %v1618
    %v1647 = vpack.c.b16 %v1623, %v1621
    %v1648 = vpack.c.b16 %v1624, %v1622
    %v1649 = vpack.c.b16 %v1627, %v1625
    %v1650 = vpack.c.b16 %v1628, %v1626
    %v1651 = vpack.c.b16 %v1631, %v1629
    %v1652 = vpack.c.b16 %v1632, %v1630
    %v1653 = vpack.c.b16 %v1635, %v1633
    %v1654 = vpack.c.b16 %v1636, %v1634
    %v1655 = vpack.c.b16 %v1639, %v1637
    %v1656 = vpack.c.b16 %v1640, %v1638
    %1673 = vmatprep.subr.bf16.mxu0 %v1656
    %1674 = vmatpush1.bf16.msra.mxu0 %v1655
    %1675 = vmatprep.subr.bf16.mxu0 %v1654
    %1676 = vmatpush1.bf16.msra.mxu0 %v1653
    %1677 = vmatprep.subr.bf16.mxu0 %v1652
    %1678 = vmatpush1.bf16.msra.mxu0 %v1651
    %1679 = vmatprep.subr.bf16.mxu0 %v1650
    %1680 = vmatpush1.bf16.msra.mxu0 %v1649
    %1681 = vmatprep.subr.bf16.mxu0 %v1648
    %1682 = vmatpush1.bf16.msra.mxu0 %v1647
    %1683 = vmatprep.subr.bf16.mxu0 %v1646
    %1684 = vmatpush1.bf16.msra.mxu0 %v1645
    %1685 = vmatprep.subr.bf16.mxu0 %v1644
    %1686 = vmatpush1.bf16.msra.mxu0 %v1643
    %1687 = vmatprep.subr.bf16.mxu0 %v1642
    %1688 = vmatpush1.bf16.msra.mxu0 %v1641
    %1689 = vmatprep.subr.bf16.mxu0 0
    %1690 = vmatpush2.bf16.msra.mxu0 0
    %1691 = vmatprep.subr.bf16.mxu0 0
    %1692 = vmatpush2.bf16.msra.mxu0 0
    %1693 = vmatprep.subr.bf16.mxu0 0
    %1694 = vmatpush2.bf16.msra.mxu0 0
    %1695 = vmatprep.subr.bf16.mxu0 0
    %1696 = vmatpush2.bf16.msra.mxu0 0
    %1697 = vmatprep.subr.bf16.mxu0 0
    %1698 = vmatpush2.bf16.msra.mxu0 0
    %1699 = vmatprep.subr.bf16.mxu0 0
    %1700 = vmatpush2.bf16.msra.mxu0 0
    %1701 = vmatprep.subr.bf16.mxu0 0
    %1702 = vmatpush2.bf16.msra.mxu0 0
    %1703 = vmatprep.subr.bf16.mxu0 0
    %1704 = vmatpush2.bf16.msra.mxu0 0
    %1705 = vmatprep.mubr.bf16.mxu0 0
    %1706 = vmatmul.mubr.bf16.gmra.mxu0 %v1564
    %v1707 = vpop.f32.mrf.mxu0
    %v1708 = vadd.f32 %v1586, %v1707
    %v1709 = vpop.f32.mrf.mxu0
    %v1710 = vadd.f32 %v1590, %v1709
    %v1711 = vpop.f32.mrf.mxu0
    %v1712 = vadd.f32 %v1586, %v1711
    %v1713 = vpop.f32.mrf.mxu0
    %v1714 = vadd.f32 %v1590, %v1713
    %1715 = vdwg.mxu0
    %v1716 = vmax.f32 %v1708, 0.0
    %v1717 = vmax.f32 %v1710, 0.0
    %v1718 = vmax.f32 %v1712, 0.0
    %v1719 = vmax.f32 %v1714, 0.0
    %v1720 = vpack.c.bf16 %v1718, %v1716
    %v1721 = vpack.c.bf16 %v1719, %v1717
    %v1722 = vld [vmem:[#allocation13] sm:$0xf]
    %v1723 = vld [vmem:[#allocation13 + $0x4] sm:$0xf]
    %v1724 = vld [vmem:[#allocation13 + $0x8] sm:$0xf]
    %v1725 = vld [vmem:[#allocation13 + $0xc] sm:$0xf]
    %v1726 = vld [vmem:[#allocation13 + $0x10] sm:$0xf]
    %v1727 = vld [vmem:[#allocation13 + $0x14] sm:$0xf]
    %v1728 = vld [vmem:[#allocation13 + $0x18] sm:$0xf]
    %v1729 = vld [vmem:[#allocation13 + $0x1c] sm:$0xf]
    %v1730 = vld [vmem:[#allocation13 + $0x20] sm:$0xf]
    %v1731 = vld [vmem:[#allocation13 + $0x24] sm:$0xf]
    %v1732 = vld [vmem:[#allocation13 + $0x28] sm:$0xf]
    %v1733 = vld [vmem:[#allocation13 + $0x2c] sm:$0xf]
    %v1734 = vld [vmem:[#allocation13 + $0x30] sm:$0xf]
    %v1735 = vld [vmem:[#allocation13 + $0x34] sm:$0xf]
    %v1736 = vld [vmem:[#allocation13 + $0x38] sm:$0xf]
    %v1737 = vld [vmem:[#allocation13 + $0x3c] sm:$0xf]
    %v1738 = vld [vmem:[#allocation13 + $0x40] sm:$0xf]
    %v1739 = vld [vmem:[#allocation13 + $0x44] sm:$0xf]
    %v1740 = vld [vmem:[#allocation13 + $0x48] sm:$0xf]
    %v1741 = vld [vmem:[#allocation13 + $0x4c] sm:$0xf]
    %v1742 = vld [vmem:[#allocation13 + $0x50] sm:$0xf]
    %v1743 = vld [vmem:[#allocation13 + $0x54] sm:$0xf]
    %v1744 = vld [vmem:[#allocation13 + $0x58] sm:$0xf]
    %v1745 = vld [vmem:[#allocation13 + $0x5c] sm:$0xf]
    %v1746 = vld [vmem:[#allocation13 + $0x60] sm:$0xf]
    %v1747 = vld [vmem:[#allocation13 + $0x64] sm:$0xf]
    %v1748 = vld [vmem:[#allocation13 + $0x68] sm:$0xf]
    %v1749 = vld [vmem:[#allocation13 + $0x6c] sm:$0xf]
    %v1750 = vld [vmem:[#allocation13 + $0x70] sm:$0xf]
    %v1751 = vld [vmem:[#allocation13 + $0x74] sm:$0xf]
    %v1752 = vld [vmem:[#allocation13 + $0x78] sm:$0xf]
    %v1753 = vld [vmem:[#allocation13 + $0x7c] sm:$0xf]
    %v1754 = vld [vmem:[#allocation14 + $0x4] sm:$0x1]
    %v1755 = vlaneseq
    %v1756 = vshrl.u32 %v1755, 7
    %v1757 = vsub.s32 0, %v1756
    %v1758 = vrot.slane %v1754, %v1757
    %v1791 = vunpack.c.l.b16 %v1722
    %v1792 = vunpack.c.l.b16 %v1723
    %v1793 = vunpack.c.l.b16 %v1724
    %v1794 = vunpack.c.l.b16 %v1725
    %v1795 = vunpack.c.l.b16 %v1726
    %v1796 = vunpack.c.l.b16 %v1727
    %v1797 = vunpack.c.l.b16 %v1728
    %v1798 = vunpack.c.l.b16 %v1729
    %v1799 = vunpack.c.l.b16 %v1730
    %v1800 = vunpack.c.l.b16 %v1731
    %v1801 = vunpack.c.l.b16 %v1732
    %v1802 = vunpack.c.l.b16 %v1733
    %v1803 = vunpack.c.l.b16 %v1734
    %v1804 = vunpack.c.l.b16 %v1735
    %v1805 = vunpack.c.l.b16 %v1736
    %v1806 = vunpack.c.l.b16 %v1737
    %v1807 = vunpack.c.l.b16 %v1738
    %v1808 = vunpack.c.l.b16 %v1739
    %v1809 = vunpack.c.l.b16 %v1740
    %v1810 = vunpack.c.l.b16 %v1741
    %v1811 = vunpack.c.l.b16 %v1742
    %v1812 = vunpack.c.l.b16 %v1743
    %v1813 = vunpack.c.l.b16 %v1744
    %v1814 = vunpack.c.l.b16 %v1745
    %v1815 = vunpack.c.l.b16 %v1746
    %v1816 = vunpack.c.l.b16 %v1747
    %v1817 = vunpack.c.l.b16 %v1748
    %v1818 = vunpack.c.l.b16 %v1749
    %v1819 = vunpack.c.l.b16 %v1750
    %v1820 = vunpack.c.l.b16 %v1751
    %v1821 = vunpack.c.l.b16 %v1752
    %v1822 = vunpack.c.l.b16 %v1753
    %v1823 = vpack.c.b16 %v1792, %v1791
    %v1824 = vpack.c.b16 %v1794, %v1793
    %v1825 = vpack.c.b16 %v1796, %v1795
    %v1826 = vpack.c.b16 %v1798, %v1797
    %v1827 = vpack.c.b16 %v1800, %v1799
    %v1828 = vpack.c.b16 %v1802, %v1801
    %v1829 = vpack.c.b16 %v1804, %v1803
    %v1830 = vpack.c.b16 %v1806, %v1805
    %v1831 = vpack.c.b16 %v1808, %v1807
    %v1832 = vpack.c.b16 %v1810, %v1809
    %v1833 = vpack.c.b16 %v1812, %v1811
    %v1834 = vpack.c.b16 %v1814, %v1813
    %v1835 = vpack.c.b16 %v1816, %v1815
    %v1836 = vpack.c.b16 %v1818, %v1817
    %v1837 = vpack.c.b16 %v1820, %v1819
    %v1838 = vpack.c.b16 %v1822, %v1821
    %1855 = vmatprep.subr.bf16.mxu0 0
    %1856 = vmatpush1.bf16.msra.mxu0 %v1830
    %1857 = vmatprep.subr.bf16.mxu0 0
    %1858 = vmatpush1.bf16.msra.mxu0 %v1829
    %1859 = vmatprep.subr.bf16.mxu0 0
    %1860 = vmatpush1.bf16.msra.mxu0 %v1828
    %1861 = vmatprep.subr.bf16.mxu0 0
    %1862 = vmatpush1.bf16.msra.mxu0 %v1827
    %1863 = vmatprep.subr.bf16.mxu0 0
    %1864 = vmatpush1.bf16.msra.mxu0 %v1826
    %1865 = vmatprep.subr.bf16.mxu0 0
    %1866 = vmatpush1.bf16.msra.mxu0 %v1825
    %1867 = vmatprep.subr.bf16.mxu0 0
    %1868 = vmatpush1.bf16.msra.mxu0 %v1824
    %1869 = vmatprep.subr.bf16.mxu0 0
    %1870 = vmatpush1.bf16.msra.mxu0 %v1823
    %1871 = vmatprep.subr.bf16.mxu0 0
    %1872 = vmatpush2.bf16.msra.mxu0 %v1838
    %1873 = vmatprep.subr.bf16.mxu0 0
    %1874 = vmatpush2.bf16.msra.mxu0 %v1837
    %1875 = vmatprep.subr.bf16.mxu0 0
    %1876 = vmatpush2.bf16.msra.mxu0 %v1836
    %1877 = vmatprep.subr.bf16.mxu0 0
    %1878 = vmatpush2.bf16.msra.mxu0 %v1835
    %1879 = vmatprep.subr.bf16.mxu0 0
    %1880 = vmatpush2.bf16.msra.mxu0 %v1834
    %1881 = vmatprep.subr.bf16.mxu0 0
    %1882 = vmatpush2.bf16.msra.mxu0 %v1833
    %1883 = vmatprep.subr.bf16.mxu0 0
    %1884 = vmatpush2.bf16.msra.mxu0 %v1832
    %1885 = vmatprep.subr.bf16.mxu0 0
    %1886 = vmatpush2.bf16.msra.mxu0 %v1831
    %1887 = vmatprep.mubr.bf16.mxu0 %v1721
    %1888 = vmatmul.mubr.bf16.gmra.mxu0 %v1720
    %v1889 = vpop.f32.mrf.mxu0
    %v1890 = vadd.f32 %v1758, %v1889
    %v1891 = vpop.f32.mrf.mxu0
    %v1892 = vpop.f32.mrf.mxu0
    %v1893 = vadd.f32 %v1758, %v1892
    %v1894 = vpop.f32.mrf.mxu0
    %1895 = vdwg.mxu0
    %v1896 = vadd.f32 %v1562, %v1890
    %v1897 = vadd.f32 %v1563, %v1893
    %v1898 = vld [vmem:[#allocation14 + $0x7] sm:$0x1]
    %v1899 = vld [vmem:[#allocation14 + $0x8] sm:$0x1]
    %1900 = vadd.xlane.f32.xlu0 %v1896
    %v1901 = vpop.xlane.xlu0 %1900
    %1902 = vadd.xlane.f32.xlu0 %v1897
    %v1903 = vpop.xlane.xlu0 %1902
    %v1904 = vmul.f32 %v1901, %v1533
    %v1905 = vmul.f32 %v1903, %v1533
    %v1906 = vsub.f32 %v1896, %v1904
    %v1907 = vsub.f32 %v1897, %v1905
    %v1908 = vmul.f32 %v1906, %v1906
    %v1909 = vmul.f32 %v1907, %v1907
    %1910 = vadd.xlane.f32.xlu0 %v1908
    %v1911 = vpop.xlane.xlu0 %1910
    %1912 = vadd.xlane.f32.xlu0 %v1909
    %v1913 = vpop.xlane.xlu0 %1912
    %v1914 = vmul.f32 %v1911, %v1533
    %v1915 = vmul.f32 %v1913, %v1533
    %v1916 = vadd.f32 %v1914, 1e-06
    %v1917 = vadd.f32 %v1915, 1e-06
    %v1918 = vrsqrt.pop %v1916
    %v1919 = vrsqrt.pop %v1917
    %v1920 = vmul.f32 %v1906, %v1918
    %v1921 = vmul.f32 %v1907, %v1919
    %v1922 = vlaneseq
    %v1923 = vshrl.u32 %v1922, 7
    %v1924 = vsub.s32 0, %v1923
    %v1925 = vrot.slane %v1898, %v1924
    %v1926 = vmul.f32 %v1920, %v1925
    %v1927 = vmul.f32 %v1921, %v1925
    %v1928 = vlaneseq
    %v1929 = vshrl.u32 %v1928, 7
    %v1930 = vsub.s32 0, %v1929
    %v1931 = vrot.slane %v1899, %v1930
    %v1932 = vadd.f32 %v1926, %v1931
    %v1933 = vadd.f32 %v1927, %v1931
    %1934 = vst [vmem:[#allocation16] sm:$0xff] %v1932
    %1935 = vst [vmem:[#allocation16 + $0x8] sm:$0xff] %v1933
    // Predicated region
    $region70: #{tpu_custom_call.1} parent=1 // pred_check
      _
    $region71: #{tpu_custom_call.1} parent=1 // pred_check_branch
      %1937 = sbr.rel (0) target = $region73
    $region72: #{tpu_custom_call.1} parent=1 // pred_region
      %s1939 = ssub.s32 256, 256
      %1940 = vsyncadd [#allocation4], %s1939
      %s1941 = sshll.u32 [#allocation16], 4
      %s1942 = int_to_ptr.vmem [resolvable:$true] %s1941
      %1947 = dma.vmem_to_hbm [thread:$0]  %s1942, 256, %s9, [#allocation4], 128, 128, 8
    $region73: #{tpu_custom_call.1} parent=1 // pred_fallthru
      _
    // Predicated region
    $region74: #{tpu_custom_call.1} parent=1 // pred_check
      _
    $region75: #{tpu_custom_call.1} parent=1 // pred_check_branch
      %1949 = sbr.rel (0) target = $region77
    $region76: #{tpu_custom_call.1} parent=1 // pred_region
      %1950 = dma.done [#allocation4], 256
    $region77: #{tpu_custom_call.1} parent=1 // pred_fallthru
      _
    %1951 = vsyncpa [#allocation3], 1
    %1952 = vsyncpa [#allocation6], 1
    %1953 = vsyncpa [#allocation9], 1
    %1954 = vsyncpa [#allocation12], 1
    %1955 = vsyncpa [#allocation15], 1
    %1956 = vsyncpa [#allocation4], 1

</llo_original>
